<compile_context>
chip_gen: v5e
topology: v5e:2x2
jax: 0.10.0
libtpu: 0.0.40
codegen_flags: <defaults>
</compile_context>

<pallas_src>
import functools

import jax
import jax.numpy as jnp
from jax import lax
from jax.experimental import pallas as pl
from jax.experimental.pallas import tpu as pltpu


def _round_up(x: int, m: int) -> int:
    return ((x + m - 1) // m) * m


# ----------------------------------------------------------------------------
# MSE: tiled, lane-dense, streaming reduction
# ----------------------------------------------------------------------------
def _mse_partial_kernel(p_ref, t_ref, o_ref):
    """Per-tile partial sums of squared differences, folded to an (8, C) slab.

    Per-step work is pure VPU (sub, mul, vreg-wise adds across sublane groups);
    the cross-lane reduce and the divide by the true element count happen once,
    outside the grid loop (fused in the same jit).
    """
    p = p_ref[...].astype(jnp.float32)
    t = t_ref[...].astype(jnp.float32)
    diff = p - t
    sq = diff * diff
    tr, c = sq.shape
    # (tr, c) -> (tr//8, 8, c) only splits the leading dim (no (8,128) tile
    # boundary crossing); the axis-0 sum is plain VPU adds between vregs.
    o_ref[...] = jnp.sum(sq.reshape(tr // 8, 8, c), axis=0)


def _mse_impl(preds, target, *, lane_cols: int = 512, max_block_rows: int = 512):
    p = jnp.asarray(preds)
    t = jnp.asarray(target)
    n = p.size  # true element count (static under jit)

    c = lane_cols
    rows = max(1, -(-n // c))
    block_rows = min(max_block_rows, _round_up(rows, 8))
    rows_p = _round_up(rows, block_rows)
    total = rows_p * c

    # Zero-pad the tail: padding contributes 0 to the sum, divide by true n below.
    p = jnp.pad(p.reshape(-1), (0, total - n)).reshape(rows_p, c)
    t = jnp.pad(t.reshape(-1), (0, total - n)).reshape(rows_p, c)
    num_tiles = rows_p // block_rows

    partials = pl.pallas_call(
        _mse_partial_kernel,
        out_shape=jax.ShapeDtypeStruct((num_tiles * 8, c), jnp.float32),
        grid_spec=pltpu.PrefetchScalarGridSpec(
            num_scalar_prefetch=0,
            grid=(num_tiles,),
            in_specs=[pl.BlockSpec((block_rows, c), lambda i: (i, 0)),
                      pl.BlockSpec((block_rows, c), lambda i: (i, 0))],
            out_specs=pl.BlockSpec((8, c), lambda i: (i, 0)),
        ),
        compiler_params=pltpu.CompilerParams(
            dimension_semantics=("parallel",)),  # v7x: tiles split across both TCs
    )(p, t)

    # Final cross-lane reduce + divide by TRUE element count (hoisted out of loop).
    return jnp.sum(partials) / jnp.float32(n)


# ----------------------------------------------------------------------------
# kappa: tightness of a filterbank (walnut-representation estimate)
# ----------------------------------------------------------------------------
def _kappa_kernel(w_ref, o_ref, re_sc, im_sc, *, d, Ls, T, diag_only, fused_dot):
    i = pl.program_id(0)
    Lp = w_ref.shape[1]

    # --- DFT tile generated in-kernel (EUP) instead of streamed from HBM. ------
    # Integer phase reduced mod Ls BEFORE the float multiply -> angle stays in
    # [0, 2*pi) at full f32 precision even for large n*f.
    n_idx = lax.broadcasted_iota(jnp.int32, (Lp, T), 0)
    f_idx = lax.broadcasted_iota(jnp.int32, (Lp, T), 1) + i * T
    phase = (n_idx * f_idx) % Ls  # TODO(synk): n*f can overflow int32 only for L*Ls > ~2e9
    ang = phase.astype(jnp.float32) * jnp.float32(2.0 * jnp.pi / Ls)
    cos_t = jnp.cos(ang)
    sin_t = jnp.sin(ang)

    w = w_ref[...]
    if fused_dot:
        # One wide MXU matmul [Jp, Lp] x [Lp, 2T]; the DFT minus sign is folded
        # into the sin half so re/im come out of a single push/drain sequence.
        cs = jnp.concatenate([cos_t.astype(w.dtype), (-sin_t).astype(w.dtype)], axis=1)
        res = jnp.dot(w, cs, preferred_element_type=jnp.float32)
        re_t = res[:, :T]
        im_t = res[:, T:]
    else:
        re_t = jnp.dot(w, cos_t.astype(w.dtype), preferred_element_type=jnp.float32)
        im_t = -jnp.dot(w, sin_t.astype(w.dtype), preferred_element_type=jnp.float32)

    off = i * T
    if T % 128 == 0:
        off = pl.multiple_of(off, 128)
    re_sc[:, pl.ds(off, T)] = re_t
    im_sc[:, pl.ds(off, T)] = im_t

    @pl.when(i == pl.num_programs(0) - 1)
    def _finalize():
        re = re_sc[...]                                   # [Jp, Ls] f32
        im = im_sc[...]
        diag = jnp.sum(re * re + im * im, axis=0, keepdims=True)   # G_0, [1, Ls]
        if diag_only:
            o_ref[0, 0] = jnp.max(diag) / jnp.min(diag)
        else:
            N = Ls // d
            upper = diag
            lower = diag
            re_s = re
            im_s = im
            # k/(d-k) symmetry: G_{d-k}(f) = G_k(f - k*N), so only k = 1..d//2
            # need the expensive [Jp, Ls] rolls/products; the partner term is a
            # cheap [1, Ls] roll of the already-computed G_k row.
            for k in range(1, d // 2 + 1):
                # Incremental constant-shift roll: reuse previous rolled buffers.
                re_s = pltpu.roll(re_s, shift=Ls - N, axis=1)
                im_s = pltpu.roll(im_s, shift=Ls - N, axis=1)
                cr = jnp.sum(re * re_s + im * im_s, axis=0, keepdims=True)
                ci = jnp.sum(im * re_s - re * im_s, axis=0, keepdims=True)
                g = jnp.sqrt(cr * cr + ci * ci)            # G_k, [1, Ls]
                if 2 * k != d:                             # add partner G_{d-k}
                    g = g + pltpu.roll(g, shift=k * N, axis=1)
                upper = upper + g
                lower = lower - g
            o_ref[0, 0] = jnp.max(upper) / jnp.min(lower)


def _pick_freq_tile(Ls: int) -> int:
    for cand in (512, 384, 256, 128):
        if Ls % cand == 0:
            return cand
    return Ls  # fallback: single tile (small / irregular Ls)


def _alias_impl(kernels, *, d, Ls, diag_only, mxu_dtype=jnp.bfloat16):
    # TODO(synk): exact hybra.utils.alias source unavailable; this implements the
    # standard walnut-representation condition-number estimate it is based on.
    # TODO(synk): complex-valued (analytic) filterbanks not handled; real kernels assumed.
    w = jnp.asarray(kernels, jnp.float32)
    w = w.reshape(-1, w.shape[-1])                      # [J, L]
    J, L = w.shape
    if Ls is None:
        Ls = L
    Ls = int(Ls)
    d = int(d)
    assert Ls % d == 0, "Ls must be divisible by the decimation factor d"

    # Pad filters to sublane multiples; zero rows/taps contribute nothing.
    Jp = _round_up(J, 8)
    Lp = _round_up(L, 8)
    # bf16 operands for the MXU (f32 accumulation) -- pass mxu_dtype=jnp.float32
    # to recover exact f32 kappa (regularizer-level ~1e-3 rel. difference).
    w = jnp.pad(w, ((0, Jp - J), (0, Lp - L))).astype(mxu_dtype)

    T = _pick_freq_tile(Ls)
    fused_dot = (T % 128 == 0)

    kern = functools.partial(_kappa_kernel, d=d, Ls=Ls, T=T,
                             diag_only=bool(diag_only), fused_dot=fused_dot)
    out = pl.pallas_call(
        kern,
        out_shape=jax.ShapeDtypeStruct((1, 1), jnp.float32),
        grid_spec=pltpu.PrefetchScalarGridSpec(
            num_scalar_prefetch=0,
            grid=(Ls // T,),
            in_specs=[pl.BlockSpec((Jp, Lp), lambda i: (0, 0))],   # resident filters
            out_specs=pl.BlockSpec((1, 1), lambda i: (0, 0),
                                   memory_space=pltpu.MemorySpace.SMEM),
            scratch_shapes=[pltpu.VMEM((Jp, Ls), jnp.float32),     # re(w_hat)
                            pltpu.VMEM((Jp, Ls), jnp.float32)],    # im(w_hat)
        ),
        compiler_params=pltpu.CompilerParams(
            dimension_semantics=("arbitrary",)),
    )(w)
    return out[0, 0]


# ----------------------------------------------------------------------------
# Jitted entry points (single dispatch per forward branch, no host syncs)
# ----------------------------------------------------------------------------
_mse_jit = jax.jit(_mse_impl)


@functools.partial(jax.jit, static_argnames=("d", "Ls", "diag_only", "mxu_dtype"))
def _kappa_only_jit(kernels, beta, *, d, Ls, diag_only, mxu_dtype):
    kappa = _alias_impl(kernels, d=d, Ls=Ls, diag_only=diag_only, mxu_dtype=mxu_dtype)
    return beta * (kappa - 1.0), kappa


@functools.partial(jax.jit, static_argnames=("d", "Ls", "diag_only", "mxu_dtype"))
def _mse_and_kappa_jit(preds, target, kernels, beta, *, d, Ls, diag_only, mxu_dtype):
    loss = _mse_impl(preds, target)
    kappa = _alias_impl(kernels, d=d, Ls=Ls, diag_only=diag_only, mxu_dtype=mxu_dtype)
    return loss, loss + beta * (kappa - 1.0), kappa


def mse_pallas(preds, target):
    return _mse_jit(preds, target)


def alias_pallas(kernels, d, Ls=None, diag_only=False, mxu_dtype=jnp.bfloat16):
    return _kappa_only_jit(kernels, jnp.float32(0.0), d=int(d),
                           Ls=None if Ls is None else int(Ls),
                           diag_only=bool(diag_only), mxu_dtype=mxu_dtype)[1]


# ----------------------------------------------------------------------------
# Module
# ----------------------------------------------------------------------------
class MSETight:
    """JAX/Pallas port of hybra._fit_dual.MSETight (forward only).

    kappa is returned as a JAX scalar (the PyTorch module calls .item(), which
    forces a device->host sync every step; call float(kappa) if required).
    """

    def __init__(self, beta: float = 0.0, fs: int = 16000, diag_only: bool = False,
                 mxu_dtype=jnp.bfloat16):
        self.beta = float(beta)
        self.fs = fs
        self.diag_only = bool(diag_only)
        self.mxu_dtype = mxu_dtype

    def forward(self, preds=None, target=None, kernels=None, d=None, Ls=None):
        if kernels is not None:
            Ls_static = None if Ls is None else int(Ls)
            if preds is not None:
                loss, tight, kappa = _mse_and_kappa_jit(
                    preds, target, kernels, jnp.float32(self.beta),
                    d=int(d), Ls=Ls_static, diag_only=self.diag_only,
                    mxu_dtype=self.mxu_dtype)
                return (loss, tight, kappa)
            else:
                reg, kappa = _kappa_only_jit(
                    kernels, jnp.float32(self.beta),
                    d=int(d), Ls=Ls_static, diag_only=self.diag_only,
                    mxu_dtype=self.mxu_dtype)
                return (reg, kappa)
        else:
            return _mse_jit(preds, target)

    __call__ = forward


# ----------------------------------------------------------------------------
# Demo
# ----------------------------------------------------------------------------
if __name__ == "__main__":
    key = jax.random.PRNGKey(0)
    k1, k2, k3 = jax.random.split(key, 3)

    # Small, deterministic example shapes.
    J, L, Ls, d = 8, 32, 128, 4
    preds = jax.random.normal(k1, (2, 8, 64), jnp.float32)
    target = preds + 0.1 * jax.random.normal(k2, (2, 8, 64), jnp.float32)
    kernels = 0.1 * jax.random.normal(k3, (J, L), jnp.float32)

    crit = MSETight(beta=1.0, fs=16000, diag_only=False)

    # Full branch: (loss, loss + beta*(kappa-1), kappa) -- one fused jit call.
    loss, loss_tight, kappa = crit(preds=preds, target=target,
                                   kernels=kernels, d=d, Ls=Ls)
    jax.block_until_ready((loss, loss_tight, kappa))

    # MSE-only branch.
    loss_only = crit(preds=preds, target=target)
    jax.block_until_ready(loss_only)

    # Kernel-only branch (diag_only variant).
    crit_diag = MSETight(beta=0.5, diag_only=True)
    reg, kappa_diag = crit_diag(kernels=kernels, d=d, Ls=Ls)
    jax.block_until_ready((reg, kappa_diag))

    # Light correctness checks (MSE exact vs. pure-JAX reference; kappa finite).
    ref_mse = jnp.mean((preds - target) ** 2)
    assert abs(float(loss_only) - float(ref_mse)) <= 1e-5 * max(1.0, abs(float(ref_mse)))
    assert bool(jnp.isfinite(kappa)) and bool(jnp.isfinite(kappa_diag))

    print("KERNEL_OK")
</pallas_src>

<mosaic_0001>
module attributes {stable_mosaic.version = 11 : i64} {
  func.func @_mse_partial_kernel(%arg0: i32, %arg1: memref<8x512xf32, #tpu.memory_space<vmem>>, %arg2: memref<8x512xf32, #tpu.memory_space<vmem>>, %arg3: memref<8x512xf32, #tpu.memory_space<vmem>>) attributes {dimension_semantics = [#tpu.dimension_semantics<parallel>], iteration_bounds = array<i64: 1>, scalar_prefetch = 0 : i64, scratch_operands = 0 : i64, tpu.core_type = #tpu.core_type<tc>, window_params = [{transform_indices = @transform_0, window_bounds = array<i64: 8, 512>}, {transform_indices = @transform_1, window_bounds = array<i64: 8, 512>}, {transform_indices = @transform_2, window_bounds = array<i64: 8, 512>}]} {
    %c0 = arith.constant 0 : index
    %c0_0 = arith.constant 0 : index
    %0 = vector.load %arg1[%c0, %c0_0] : memref<8x512xf32, #tpu.memory_space<vmem>>, vector<8x512xf32>
    %c0_1 = arith.constant 0 : index
    %c0_2 = arith.constant 0 : index
    %1 = vector.load %arg2[%c0_1, %c0_2] : memref<8x512xf32, #tpu.memory_space<vmem>>, vector<8x512xf32>
    %2 = arith.subf %0, %1 : vector<8x512xf32>
    %3 = arith.mulf %2, %2 : vector<8x512xf32>
    %4 = vector.shape_cast %3 : vector<8x512xf32> to vector<1x8x512xf32>
    %cst = arith.constant dense<0.000000e+00> : vector<8x512xf32>
    %5 = vector.multi_reduction <add>, %4, %cst [0] : vector<1x8x512xf32> to vector<8x512xf32>
    %c0_3 = arith.constant 0 : index
    %c0_4 = arith.constant 0 : index
    %6 = vector.load %arg3[%c0_3, %c0_4] : memref<8x512xf32, #tpu.memory_space<vmem>>, vector<8x512xf32>
    tpu.vector_store %arg3[%c0_3, %c0_4], %5 {strides = array<i32>} : memref<8x512xf32, #tpu.memory_space<vmem>>, vector<8x512xf32>,
    return
  }
  func.func @transform_0(%arg0: i32) -> (i32, i32) {
    %c0_i32 = arith.constant 0 : i32
    %c0_i32_0 = arith.constant 0 : i32
    return %arg0, %c0_i32 : i32, i32
  }
  func.func @transform_1(%arg0: i32) -> (i32, i32) {
    %c0_i32 = arith.constant 0 : i32
    %c0_i32_0 = arith.constant 0 : i32
    return %arg0, %c0_i32 : i32, i32
  }
  func.func @transform_2(%arg0: i32) -> (i32, i32) {
    %c0_i32 = arith.constant 0 : i32
    %c0_i32_0 = arith.constant 0 : i32
    return %arg0, %c0_i32 : i32, i32
  }
}

module attributes {stable_mosaic.version = 11 : i64} {
  func.func @_kappa_kernel(%arg0: i32, %arg1: memref<8x32xbf16, #tpu.memory_space<vmem>>, %arg2: memref<1x1xf32, #tpu.memory_space<smem>>, %arg3: memref<8x128xf32, #tpu.memory_space<vmem>>, %arg4: memref<8x128xf32, #tpu.memory_space<vmem>>) attributes {dimension_semantics = [#tpu.dimension_semantics<arbitrary>], iteration_bounds = array<i64: 1>, scalar_prefetch = 0 : i64, scratch_operands = 2 : i64, tpu.core_type = #tpu.core_type<tc>, window_params = [{pipeline_mode = #tpu.pipeline_mode<synchronous>, transform_indices = @transform_0, window_bounds = array<i64: 8, 32>}, {transform_indices = @transform_1, window_bounds = array<i64: 1, 1>}]} {
    %0 = tpu.iota {dimensions = array<i32: 0>} : vector<32x128xi32>
    %1 = tpu.iota {dimensions = array<i32: 1>} : vector<32x128xi32>
    %c128_i32 = arith.constant 128 : i32
    %2 = arith.muli %arg0, %c128_i32 : i32
    %3 = vector.broadcast %2 : i32 to vector<32x128xi32>
    %4 = arith.addi %1, %3 : vector<32x128xi32>
    %5 = arith.muli %0, %4 : vector<32x128xi32>
    %c128_i32_0 = arith.constant 128 : i32
    %c0_i32 = arith.constant 0 : i32
    %6 = arith.cmpi eq, %c128_i32_0, %c0_i32 : i32
    %c1_i32 = arith.constant 1 : i32
    %7 = arith.select %6, %c1_i32, %c128_i32_0 : i32
    %8 = vector.broadcast %7 : i32 to vector<32x128xi32>
    %9 = arith.remsi %5, %8 : vector<32x128xi32>
    %c0_i32_1 = arith.constant 0 : i32
    %10 = vector.broadcast %c0_i32_1 : i32 to vector<32x128xi32>
    %11 = arith.cmpi ne, %9, %10 : vector<32x128xi32>
    %c0_i32_2 = arith.constant 0 : i32
    %12 = vector.broadcast %c0_i32_2 : i32 to vector<32x128xi32>
    %13 = arith.cmpi slt, %9, %12 : vector<32x128xi32>
    %c0_i32_3 = arith.constant 0 : i32
    %14 = arith.cmpi slt, %7, %c0_i32_3 : i32
    %15 = vector.broadcast %14 : i1 to vector<32x128xi1>
    %16 = vector.broadcast %15 : vector<32x128xi1> to vector<32x128xi1>
    %17 = arith.xori %13, %16 : vector<32x128xi1>
    %18 = arith.andi %17, %11 : vector<32x128xi1>
    %19 = vector.broadcast %7 : i32 to vector<32x128xi32>
    %20 = arith.addi %9, %19 : vector<32x128xi32>
    %21 = arith.select %18, %20, %9 : vector<32x128xi1>, vector<32x128xi32>
    %22 = arith.sitofp %21 : vector<32x128xi32> to vector<32x128xf32>
    %cst = arith.constant 0.0490873866 : f32
    %23 = vector.broadcast %cst : f32 to vector<32x128xf32>
    %24 = arith.mulf %22, %23 : vector<32x128xf32>
    %25 = math.cos %24 : vector<32x128xf32>
    %26 = math.sin %24 : vector<32x128xf32>
    %c0 = arith.constant 0 : index
    %c0_4 = arith.constant 0 : index
    %27 = vector.load %arg1[%c0, %c0_4] : memref<8x32xbf16, #tpu.memory_space<vmem>>, vector<8x32xbf16>
    %28 = arith.truncf %25 : vector<32x128xf32> to vector<32x128xbf16>
    %cst_5 = arith.constant 0.000000e+00 : f32
    %29 = vector.broadcast %cst_5 : f32 to vector<32x128xf32>
    %30 = arith.subf %29, %26 : vector<32x128xf32>
    %31 = arith.truncf %30 : vector<32x128xf32> to vector<32x128xbf16>
    %32 = tpu.concatenate %28, %31 in 1 : vector<32x128xbf16>, vector<32x128xbf16> -> vector<32x256xbf16>
    %cst_6 = arith.constant dense<0.000000e+00> : vector<8x256xf32>
    %33 = tpu.matmul %27, %32, %cst_6 {dimension_numbers = #tpu.dot_dimension_numbers<[1], [0], [0], [1], [0, 0, 1, 1], [], []>} : vector<8x32xbf16>, vector<32x256xbf16>, vector<8x256xf32> -> vector<8x256xf32>
    %34 = vector.extract_strided_slice %33 {offsets = [0, 0], sizes = [8, 128], strides = [1, 1]} : vector<8x256xf32> to vector<8x128xf32>
    %35 = vector.extract_strided_slice %33 {offsets = [0, 128], sizes = [8, 128], strides = [1, 1]} : vector<8x256xf32> to vector<8x128xf32>
    %c128_i32_7 = arith.constant 128 : i32
    %36 = arith.muli %arg0, %c128_i32_7 : i32
    %37 = tpu.assume_multiple %36, 128 : i32
    %c0_8 = arith.constant 0 : index
    %38 = arith.index_cast %37 : i32 to index
    %39 = vector.load %arg3[%c0_8, %38] : memref<8x128xf32, #tpu.memory_space<vmem>>, vector<8x128xf32>
    tpu.vector_store %arg3[%c0_8, %38], %34 {strides = array<i32>} : memref<8x128xf32, #tpu.memory_space<vmem>>, vector<8x128xf32>,
    %c0_9 = arith.constant 0 : index
    %40 = arith.index_cast %37 : i32 to index
    %41 = vector.load %arg4[%c0_9, %40] : memref<8x128xf32, #tpu.memory_space<vmem>>, vector<8x128xf32>
    tpu.vector_store %arg4[%c0_9, %40], %35 {strides = array<i32>} : memref<8x128xf32, #tpu.memory_space<vmem>>, vector<8x128xf32>,
    %c0_i32_10 = arith.constant 0 : i32
    %42 = arith.cmpi eq, %arg0, %c0_i32_10 : i32
    %43 = arith.extui %42 : i1 to i32
    %c0_i32_11 = arith.constant 0 : i32
    %44 = arith.cmpi ne, %43, %c0_i32_11 : i32
    scf.if %44 {
      %c0_12 = arith.constant 0 : index
      %c0_13 = arith.constant 0 : index
      %45 = vector.load %arg3[%c0_12, %c0_13] : memref<8x128xf32, #tpu.memory_space<vmem>>, vector<8x128xf32>
      %c0_14 = arith.constant 0 : index
      %c0_15 = arith.constant 0 : index
      %46 = vector.load %arg4[%c0_14, %c0_15] : memref<8x128xf32, #tpu.memory_space<vmem>>, vector<8x128xf32>
      %47 = arith.mulf %45, %45 : vector<8x128xf32>
      %48 = arith.mulf %46, %46 : vector<8x128xf32>
      %49 = arith.addf %47, %48 : vector<8x128xf32>
      %cst_16 = arith.constant dense<0.000000e+00> : vector<128xf32>
      %50 = vector.multi_reduction <add>, %49, %cst_16 [0] : vector<8x128xf32> to vector<128xf32>
      %51 = vector.shape_cast %50 : vector<128xf32> to vector<1x128xf32>
      %c96_i32 = arith.constant 96 : i32
      %52 = tpu.dynamic_rotate %45 by %c96_i32 dim 1 : vector<8x128xf32>, i32 -> vector<8x128xf32>
      %c96_i32_17 = arith.constant 96 : i32
      %53 = tpu.dynamic_rotate %46 by %c96_i32_17 dim 1 : vector<8x128xf32>, i32 -> vector<8x128xf32>
      %54 = arith.mulf %45, %52 : vector<8x128xf32>
      %55 = arith.mulf %46, %53 : vector<8x128xf32>
      %56 = arith.addf %54, %55 : vector<8x128xf32>
      %cst_18 = arith.constant dense<0.000000e+00> : vector<128xf32>
      %57 = vector.multi_reduction <add>, %56, %cst_18 [0] : vector<8x128xf32> to vector<128xf32>
      %58 = vector.shape_cast %57 : vector<128xf32> to vector<1x128xf32>
      %59 = arith.mulf %46, %52 : vector<8x128xf32>
      %60 = arith.mulf %45, %53 : vector<8x128xf32>
      %61 = arith.subf %59, %60 : vector<8x128xf32>
      %cst_19 = arith.constant dense<0.000000e+00> : vector<128xf32>
      %62 = vector.multi_reduction <add>, %61, %cst_19 [0] : vector<8x128xf32> to vector<128xf32>
      %63 = vector.shape_cast %62 : vector<128xf32> to vector<1x128xf32>
      %64 = arith.mulf %58, %58 : vector<1x128xf32>
      %65 = arith.mulf %63, %63 : vector<1x128xf32>
      %66 = arith.addf %64, %65 : vector<1x128xf32>
      %67 = math.sqrt %66 : vector<1x128xf32>
      %c32_i32 = arith.constant 32 : i32
      %68 = tpu.dynamic_rotate %67 by %c32_i32 dim 1 : vector<1x128xf32>, i32 -> vector<1x128xf32>
      %69 = arith.addf %67, %68 : vector<1x128xf32>
      %70 = arith.addf %51, %69 : vector<1x128xf32>
      %71 = arith.subf %51, %69 : vector<1x128xf32>
      %c96_i32_20 = arith.constant 96 : i32
      %72 = tpu.dynamic_rotate %52 by %c96_i32_20 dim 1 : vector<8x128xf32>, i32 -> vector<8x128xf32>
      %c96_i32_21 = arith.constant 96 : i32
      %73 = tpu.dynamic_rotate %53 by %c96_i32_21 dim 1 : vector<8x128xf32>, i32 -> vector<8x128xf32>
      %74 = arith.mulf %45, %72 : vector<8x128xf32>
      %75 = arith.mulf %46, %73 : vector<8x128xf32>
      %76 = arith.addf %74, %75 : vector<8x128xf32>
      %cst_22 = arith.constant dense<0.000000e+00> : vector<128xf32>
      %77 = vector.multi_reduction <add>, %76, %cst_22 [0] : vector<8x128xf32> to vector<128xf32>
      %78 = vector.shape_cast %77 : vector<128xf32> to vector<1x128xf32>
      %79 = arith.mulf %46, %72 : vector<8x128xf32>
      %80 = arith.mulf %45, %73 : vector<8x128xf32>
      %81 = arith.subf %79, %80 : vector<8x128xf32>
      %cst_23 = arith.constant dense<0.000000e+00> : vector<128xf32>
      %82 = vector.multi_reduction <add>, %81, %cst_23 [0] : vector<8x128xf32> to vector<128xf32>
      %83 = vector.shape_cast %82 : vector<128xf32> to vector<1x128xf32>
      %84 = arith.mulf %78, %78 : vector<1x128xf32>
      %85 = arith.mulf %83, %83 : vector<1x128xf32>
      %86 = arith.addf %84, %85 : vector<1x128xf32>
      %87 = math.sqrt %86 : vector<1x128xf32>
      %88 = arith.addf %70, %87 : vector<1x128xf32>
      %89 = arith.subf %71, %87 : vector<1x128xf32>
      %90 = vector.shape_cast %88 : vector<1x128xf32> to vector<1x1x128xf32>
      %cst_24 = arith.constant dense<0xFF800000> : vector<1xf32>
      %91 = vector.multi_reduction <maximumf>, %90, %cst_24 [1, 2] : vector<1x1x128xf32> to vector<1xf32>
      %92 = vector.shape_cast %91 : vector<1xf32> to vector<1x1x1xf32>
      %93 = vector.extract %92[0, 0, 0] : f32 from vector<1x1x1xf32>
      %94 = vector.shape_cast %89 : vector<1x128xf32> to vector<1x1x128xf32>
      %cst_25 = arith.constant dense<0x7F800000> : vector<1xf32>
      %95 = vector.multi_reduction <minimumf>, %94, %cst_25 [1, 2] : vector<1x1x128xf32> to vector<1xf32>
      %96 = vector.shape_cast %95 : vector<1xf32> to vector<1x1x1xf32>
      %97 = vector.extract %96[0, 0, 0] : f32 from vector<1x1x1xf32>
      %98 = arith.divf %93, %97 : f32
      %c0_26 = arith.constant 0 : index
      %c0_27 = arith.constant 0 : index
      %99 = memref.load %arg2[%c0_26, %c0_27] : memref<1x1xf32, #tpu.memory_space<smem>>
      memref.store %98, %arg2[%c0_26, %c0_27] : memref<1x1xf32, #tpu.memory_space<smem>>
    } else {
    }
    return
  }
  func.func @transform_0(%arg0: i32) -> (i32, i32) {
    %c0_i32 = arith.constant 0 : i32
    %c0_i32_0 = arith.constant 0 : i32
    %c0_i32_1 = arith.constant 0 : i32
    return %c0_i32, %c0_i32_0 : i32, i32
  }
  func.func @transform_1(%arg0: i32) -> (i32, i32) {
    %c0_i32 = arith.constant 0 : i32
    %c0_i32_0 = arith.constant 0 : i32
    %c0_i32_1 = arith.constant 0 : i32
    return %c0_i32, %c0_i32_0 : i32, i32
  }
}

</mosaic_0001>

<llo_original>
// kernel: _mse_and_kappa_jit.2
$region0: #{_mse_and_kappa_jit.2}
  #allocation0 [shape = 'u32[]', space=smem, size = 0x4, offset = 0x4, fixed_abs, tag = 'smem constant byte address 0x4 - core index']
  #allocation1 [shape = 'u32[72,128]{1,0:T(1,128)}', space=vmem, size = 0x9000, scoped, tag = 'internal scratch']
  %s0 = inlined_call_operand.vmem [shape: f32[8,512], index: 0, kind: input, shape index: {}]
  %s1 = inlined_call_operand.vmem [shape: f32[8,512], index: 1, kind: input, shape index: {}]
  %s2 = inlined_call_operand.vmem [shape: f32[8,512], index: 2, kind: output, shape index: {}]
  %s3 = sld [smem:[#allocation0]]
  $region18: #{_mse_and_kappa_jit.2} parent=0
    _
  %s5 = ssub.s32 1, %s3
  %s6 = scalar_select 0, %s5, %s3
  // Predicated region
  $region2: #{_mse_and_kappa_jit.2} parent=0 // pred_check
    _
  $region3: #{_mse_and_kappa_jit.2} parent=0 // pred_check_branch
    %8 = sbr.rel (0) target = $region5
  $region4: #{_mse_and_kappa_jit.2} parent=0 // pred_region
    _
  $region5: #{_mse_and_kappa_jit.2} parent=0 // pred_fallthru
    _
  // Predicated region
  $region6: #{_mse_and_kappa_jit.2} parent=0 // pred_check
    _
  $region7: #{_mse_and_kappa_jit.2} parent=0 // pred_check_branch
    %10 = sbr.rel (0) target = $region9
  $region8: #{_mse_and_kappa_jit.2} parent=0 // pred_region
    _
  $region9: #{_mse_and_kappa_jit.2} parent=0 // pred_fallthru
    _
  %v11 = vld [vmem:[%s0] sm:$0xff]
  %v12 = vld [vmem:[%s0 + $0x8] sm:$0xff]
  %v13 = vld [vmem:[%s0 + $0x10] sm:$0xff]
  %v14 = vld [vmem:[%s0 + $0x18] sm:$0xff]
  %v15 = vld [vmem:[%s1] sm:$0xff]
  %v16 = vld [vmem:[%s1 + $0x8] sm:$0xff]
  %v17 = vld [vmem:[%s1 + $0x10] sm:$0xff]
  %v18 = vld [vmem:[%s1 + $0x18] sm:$0xff]
  %v19 = vsub.f32 %v11, %v15
  %v20 = vsub.f32 %v12, %v16
  %v21 = vsub.f32 %v13, %v17
  %v22 = vsub.f32 %v14, %v18
  %v23 = vmul.f32 %v19, %v19
  %v24 = vmul.f32 %v20, %v20
  %v25 = vmul.f32 %v21, %v21
  %v26 = vmul.f32 %v22, %v22
  %v27 = vadd.f32 %v23, 0.0
  %v28 = vadd.f32 %v24, 0.0
  %v29 = vadd.f32 %v25, 0.0
  %v30 = vadd.f32 %v26, 0.0
  %31 = vst [vmem:[%s2] sm:$0xff] %v27
  %32 = vst [vmem:[%s2 + $0x8] sm:$0xff] %v28
  %33 = vst [vmem:[%s2 + $0x10] sm:$0xff] %v29
  %34 = vst [vmem:[%s2 + $0x18] sm:$0xff] %v30
  // Predicated region
  $region10: #{_mse_and_kappa_jit.2} parent=0 // pred_check
    _
  $region11: #{_mse_and_kappa_jit.2} parent=0 // pred_check_branch
    %36 = sbr.rel (0) target = $region13
  $region12: #{_mse_and_kappa_jit.2} parent=0 // pred_region
    _
  $region13: #{_mse_and_kappa_jit.2} parent=0 // pred_fallthru
    _
  // Predicated region
  $region14: #{_mse_and_kappa_jit.2} parent=0 // pred_check
    _
  $region15: #{_mse_and_kappa_jit.2} parent=0 // pred_check_branch
    %38 = sbr.rel (0) target = $region17
  $region16: #{_mse_and_kappa_jit.2} parent=0 // pred_region
    _
  $region17: #{_mse_and_kappa_jit.2} parent=0 // pred_fallthru
    _

// kernel: _mse_and_kappa_jit.3
$region0: #{_mse_and_kappa_jit.3}
  #allocation0 [shape = 'u32[]', space=smem, size = 0x4, offset = 0x4, fixed_abs, tag = 'smem constant byte address 0x4 - core index']
  #allocation1 [shape = 'u32[72,128]{1,0:T(1,128)}', space=vmem, size = 0x9000, scoped, tag = 'internal scratch']
  #allocation2 [shape = 'f32[8,128]{1,0:T(8,128)}', space=vmem, size = 0x1000, scoped, tag = 'scratch operand']
  #allocation3 [shape = 'f32[8,128]{1,0:T(8,128)}', space=vmem, size = 0x1000, scoped, tag = 'scratch operand']
  %s0 = inlined_call_operand.vmem [shape: bf16[8,32], index: 0, kind: input, shape index: {}]
  %s1 = inlined_call_operand.hbm [shape: f32[1,1], index: 1, kind: output, shape index: {}]
  %s2 = sld [smem:[#allocation0]]
  $region18: #{_mse_and_kappa_jit.3} parent=0
    _
  %s4 = ssub.s32 1, %s2
  %s5 = scalar_select 0, %s4, %s2
  $region1: #{_mse_and_kappa_jit.3} parent=0
    #allocation4 [shape = 'u8[512]{0}', space=smem, size = 0x200, scoped, tag = 'output window, operand 0, single buffered']
    #allocation5 [shape = 's32[1]{0}', space=sflag, size = 0x4, scoped, tag = 'scoped memory for _mse_and_kappa_jit.3']
    %6 = vsyncpa [#allocation5], 0
    // Predicated region
    $region2: #{_mse_and_kappa_jit.3} parent=1 // pred_check
      _
    $region3: #{_mse_and_kappa_jit.3} parent=1 // pred_check_branch
      %8 = sbr.rel (0) target = $region5
    $region4: #{_mse_and_kappa_jit.3} parent=1 // pred_region
      _
    $region5: #{_mse_and_kappa_jit.3} parent=1 // pred_fallthru
      _
    %v10 = vlaneseq
    %v11 = vshrl.u32 %v10, 7
    %v12 = vadd.s32 %v11, 8
    %v13 = vadd.s32 %v11, 16
    %v14 = vadd.s32 %v11, 24
    %v15 = vlaneseq
    %v16 = vand.u32 %v15, 127
    %s17 = smul.u32 0, 128
    %v18 = vstv %s17
    %v19 = vadd.s32 %v16, %v18
    %v20 = vmul.u32 %v11, %v19
    %v21 = vmul.u32 %v12, %v19
    %v22 = vmul.u32 %v13, %v19
    %v23 = vmul.u32 %v14, %v19
    %vm24 = vcmp.lt.s32.totalorder %v20, 0
    %v25 = vsub.s32 0, %v20
    %v26 = vsel %vm24, %v25, %v20
    %v27 = vshrl.u32 %v26, 7
    %v28 = vand.u32 %v26, 127
    %v29 = vsub.s32 0, %v28
    %v30 = vsel %vm24, %v29, %v28
    %vm31 = vcmp.lt.s32.totalorder %v21, 0
    %v32 = vsub.s32 0, %v21
    %v33 = vsel %vm31, %v32, %v21
    %v34 = vshrl.u32 %v33, 7
    %v35 = vand.u32 %v33, 127
    %v36 = vsub.s32 0, %v35
    %v37 = vsel %vm31, %v36, %v35
    %vm38 = vcmp.lt.s32.totalorder %v22, 0
    %v39 = vsub.s32 0, %v22
    %v40 = vsel %vm38, %v39, %v22
    %v41 = vshrl.u32 %v40, 7
    %v42 = vand.u32 %v40, 127
    %v43 = vsub.s32 0, %v42
    %v44 = vsel %vm38, %v43, %v42
    %vm45 = vcmp.lt.s32.totalorder %v23, 0
    %v46 = vsub.s32 0, %v23
    %v47 = vsel %vm45, %v46, %v23
    %v48 = vshrl.u32 %v47, 7
    %v49 = vand.u32 %v47, 127
    %v50 = vsub.s32 0, %v49
    %v51 = vsel %vm45, %v50, %v49
    %vm52 = vcmp.ne.s32.totalorder %v30, 0
    %vm53 = vcmp.ne.s32.totalorder %v37, 0
    %vm54 = vcmp.ne.s32.totalorder %v44, 0
    %vm55 = vcmp.ne.s32.totalorder %v51, 0
    %vm56 = vcmp.lt.s32.totalorder %v30, 0
    %vm57 = vcmp.lt.s32.totalorder %v37, 0
    %vm58 = vcmp.lt.s32.totalorder %v44, 0
    %vm59 = vcmp.lt.s32.totalorder %v51, 0
    %vm60 = vmand %vm56, %vm52
    %vm61 = vmand %vm57, %vm53
    %vm62 = vmand %vm58, %vm54
    %vm63 = vmand %vm59, %vm55
    %v64 = vadd.s32 %v30, 128
    %v65 = vadd.s32 %v37, 128
    %v66 = vadd.s32 %v44, 128
    %v67 = vadd.s32 %v51, 128
    %v68 = vsel %vm60, %v64, %v30
    %v69 = vsel %vm61, %v65, %v37
    %v70 = vsel %vm62, %v66, %v44
    %v71 = vsel %vm63, %v67, %v51
    %v72 = vcvt.s32.f32 %v68
    %v73 = vcvt.s32.f32 %v69
    %v74 = vcvt.s32.f32 %v70
    %v75 = vcvt.s32.f32 %v71
    %v76 = vmul.f32 %v72, 0.049087387
    %v77 = vmul.f32 %v73, 0.049087387
    %v78 = vmul.f32 %v74, 0.049087387
    %v79 = vmul.f32 %v75, 0.049087387
    %v80 = vand.u32 2147483647, %v76
    %vm81 = vcmp.le.f32.partialorder %v80, 0.7853982
    %vm82 = vcmp.lt.s32.totalorder %v76, 0
    %v83 = vand.u32 %v76, 2139095040
    %v84 = vshrl.u32 %v83, 23
    %v85 = vsub.s32 %v84, 127
    %v86 = vand.u32 2147483647, %v76
    %v87 = vand.u32 %v86, 8388607
    %v88 = vor.u32 %v87, 8388608
    %v89 = vsub.s32 0, %v88
    %v90 = vadd.s32 %v85, 1
    %vm91 = vcmp.gt.s32.totalorder %v90, 0
    %v92 = vsel %vm91, %v90, 0
    %v93 = vshrl.u32 %v92, 5
    %v94 = vand.u32 %v92, 31
    %v95 = vsub.s32 32, %v94
    %v96 = vshrl.u32 683565275, %v95
    %v97 = vshll.u32 683565275, %v94
    %v98 = vshrl.u32 2475754826, %v95
    %v99 = vor.u32 %v97, %v98
    %v100 = vshll.u32 2475754826, %v94
    %v101 = vshrl.u32 2131351028, %v95
    %v102 = vor.u32 %v100, %v101
    %v103 = vshll.u32 2131351028, %v94
    %v104 = vshrl.u32 2102212464, %v95
    %v105 = vor.u32 %v103, %v104
    %v106 = vshll.u32 2102212464, %v94
    %v107 = vshrl.u32 920167782, %v95
    %v108 = vor.u32 %v106, %v107
    %v109 = vshll.u32 920167782, %v94
    %v110 = vshrl.u32 1326507024, %v95
    %v111 = vor.u32 %v109, %v110
    %vm112 = vcmp.lt.s32.totalorder %v93, 1
    %vm113 = vcmp.lt.s32.totalorder %v93, 2
    %vm114 = vcmp.lt.s32.totalorder %v93, 3
    %vm115 = vcmp.lt.s32.totalorder %v93, 4
    %v116 = vsel %vm112, %v96, %v99
    %v117 = vsel %vm115, %v105, 2102212464
    %v118 = vsel %vm114, %v102, %v117
    %v119 = vsel %vm113, %v116, %v118
    %v120 = vsel %vm112, %v99, %v102
    %v121 = vsel %vm115, %v108, 920167782
    %v122 = vsel %vm114, %v105, %v121
    %v123 = vsel %vm113, %v120, %v122
    %v124 = vsel %vm112, %v102, %v105
    %v125 = vsel %vm115, %v111, 1326507024
    %v126 = vsel %vm114, %v108, %v125
    %v127 = vsel %vm113, %v124, %v126
    %v128 = vshll.u32 %v88, 8
    %v129 = vand.u32 %v128, 65535
    %v130 = vshrl.u32 %v128, 16
    %v131 = vand.u32 %v127, 65535
    %v132 = vshrl.u32 %v127, 16
    %v133 = vmul.u32 %v129, %v131
    %v134 = vmul.u32 %v129, %v132
    %v135 = vmul.u32 %v130, %v131
    %v136 = vmul.u32 %v130, %v132
    %v137 = vshll.u32 %v134, 16
    %v138 = vshrl.u32 %v134, 16
    %v139 = vshll.u32 %v135, 16
    %v140 = vshrl.u32 %v135, 16
    %vm141 = vc.u32 %v133, %v137
    %v142 = vsel %vm141, 1, 0
    %v143 = vadd.s32 %v133, %v137
    %v144 = vadd.s32 %v136, %v142
    %vm145 = vc.u32 %v143, %v139
    %v146 = vsel %vm145, 1, 0
    %v147 = vadd.s32 %v143, %v139
    %v148 = vadd.s32 %v144, %v146
    %v149 = vadd.s32 %v148, %v138
    %v150 = vadd.s32 %v149, %v140
    %v151 = vand.u32 %v128, 65535
    %v152 = vshrl.u32 %v128, 16
    %v153 = vand.u32 %v123, 65535
    %v154 = vshrl.u32 %v123, 16
    %v155 = vmul.u32 %v151, %v153
    %v156 = vmul.u32 %v151, %v154
    %v157 = vmul.u32 %v152, %v153
    %v158 = vmul.u32 %v152, %v154
    %v159 = vshll.u32 %v156, 16
    %v160 = vshrl.u32 %v156, 16
    %v161 = vshll.u32 %v157, 16
    %v162 = vshrl.u32 %v157, 16
    %vm163 = vc.u32 %v155, %v159
    %v164 = vsel %vm163, 1, 0
    %v165 = vadd.s32 %v155, %v159
    %v166 = vadd.s32 %v158, %v164
    %vm167 = vc.u32 %v165, %v161
    %v168 = vsel %vm167, 1, 0
    %v169 = vadd.s32 %v165, %v161
    %v170 = vadd.s32 %v166, %v168
    %v171 = vadd.s32 %v170, %v160
    %v172 = vadd.s32 %v171, %v162
    %v173 = vmul.u32 %v128, %v119
    %v174 = vadd.s32 %v150, %v169
    %vm175 = vc.u32 %v150, %v169
    %v176 = vadd.s32 %v172, 1
    %v177 = vsel %vm175, %v176, %v172
    %v178 = vadd.s32 %v173, %v177
    %v179 = vadd.s32 %v178, 536870912
    %v180 = vshrl.u32 %v179, 30
    %v181 = vshll.u32 %v180, 30
    %v182 = vsub.s32 %v178, %v181
    %vm183 = vcmp.lt.s32.totalorder %v182, 0
    %v184 = vsub.s32 0, %v182
    %v185 = vsel %vm183, %v184, %v182
    %v186 = vclz %v185
    %v187 = vsub.s32 %v186, 2
    %vm188 = vcmp.gt.s32.totalorder 0, %v187
    %v189 = vsel %vm188, 0, %v187
    %v190 = vsub.s32 32, %v189
    %v191 = vshll.u32 %v182, %v189
    %v192 = vshrl.u32 %v174, %v190
    %v193 = vor.u32 %v191, %v192
    %v194 = vsub.s32 4294967266, %v189
    %v195 = vadd.s32 %v194, 127
    %v196 = vshll.u32 %v195, 23
    %v197 = vor.u32 4788187, %v196
    %v198 = vand.u32 2147483647, %v197
    %v200 = vcvt.s32.f32 %v193
    %v201 = vmul.f32 %v200, %v198
    %v202 = vxor.u32 %v201, 2147483648
    %v203 = vsel %vm82, %v202, %v201
    %v204 = vsub.s32 4, %v180
    %v205 = vsel %vm82, %v204, %v180
    %v206 = vsel %vm81, %v76, %v203
    %v207 = vsel %vm81, 0, %v205
    %v208 = vmul.f32 %v206, %v206
    %v209 = vmul.f32 %v208, -0.001358992
    %v210 = vadd.f32 %v209, 0.041655596
    %v211 = vmul.f32 %v208, %v210
    %v212 = vadd.f32 %v211, -0.4999988
    %v213 = vmul.f32 %v208, %v212
    %v214 = vadd.f32 1.0, %v213
    %v215 = vmul.f32 %v206, %v206
    %v216 = vmul.f32 %v215, -0.00019511016
    %v217 = vadd.f32 %v216, 0.008332121
    %v218 = vmul.f32 %v215, %v217
    %v219 = vadd.f32 %v218, -0.16666654
    %v220 = vmul.f32 %v215, %v219
    %v221 = vadd.f32 %v220, 1.0
    %v222 = vmul.f32 %v221, %v206
    %vm223 = vweird.f32 %v76
    %v224 = vand.u32 %v207, 3
    %vm225 = vcmp.lt.s32.totalorder %v224, 2
    %vm226 = vcmp.eq.s32.totalorder %v224, 0
    %v227 = vxor.u32 %v222, 2147483648
    %v228 = vsel %vm226, %v214, %v227
    %vm229 = vcmp.eq.s32.totalorder %v224, 2
    %v230 = vxor.u32 %v214, 2147483648
    %v231 = vsel %vm229, %v230, %v222
    %v232 = vsel %vm225, %v228, %v231
    %v233 = vsel %vm223, nan, %v232
    %v234 = vand.u32 2147483647, %v77
    %vm235 = vcmp.le.f32.partialorder %v234, 0.7853982
    %vm236 = vcmp.lt.s32.totalorder %v77, 0
    %v237 = vand.u32 %v77, 2139095040
    %v238 = vshrl.u32 %v237, 23
    %v239 = vsub.s32 %v238, 127
    %v240 = vand.u32 2147483647, %v77
    %v241 = vand.u32 %v240, 8388607
    %v242 = vor.u32 %v241, 8388608
    %v243 = vsub.s32 0, %v242
    %v244 = vadd.s32 %v239, 1
    %vm245 = vcmp.gt.s32.totalorder %v244, 0
    %v246 = vsel %vm245, %v244, 0
    %v247 = vshrl.u32 %v246, 5
    %v248 = vand.u32 %v246, 31
    %v249 = vsub.s32 32, %v248
    %v250 = vshrl.u32 683565275, %v249
    %v251 = vshll.u32 683565275, %v248
    %v252 = vshrl.u32 2475754826, %v249
    %v253 = vor.u32 %v251, %v252
    %v254 = vshll.u32 2475754826, %v248
    %v255 = vshrl.u32 2131351028, %v249
    %v256 = vor.u32 %v254, %v255
    %v257 = vshll.u32 2131351028, %v248
    %v258 = vshrl.u32 2102212464, %v249
    %v259 = vor.u32 %v257, %v258
    %v260 = vshll.u32 2102212464, %v248
    %v261 = vshrl.u32 920167782, %v249
    %v262 = vor.u32 %v260, %v261
    %v263 = vshll.u32 920167782, %v248
    %v264 = vshrl.u32 1326507024, %v249
    %v265 = vor.u32 %v263, %v264
    %vm266 = vcmp.lt.s32.totalorder %v247, 1
    %vm267 = vcmp.lt.s32.totalorder %v247, 2
    %vm268 = vcmp.lt.s32.totalorder %v247, 3
    %vm269 = vcmp.lt.s32.totalorder %v247, 4
    %v270 = vsel %vm266, %v250, %v253
    %v271 = vsel %vm269, %v259, 2102212464
    %v272 = vsel %vm268, %v256, %v271
    %v273 = vsel %vm267, %v270, %v272
    %v274 = vsel %vm266, %v253, %v256
    %v275 = vsel %vm269, %v262, 920167782
    %v276 = vsel %vm268, %v259, %v275
    %v277 = vsel %vm267, %v274, %v276
    %v278 = vsel %vm266, %v256, %v259
    %v279 = vsel %vm269, %v265, 1326507024
    %v280 = vsel %vm268, %v262, %v279
    %v281 = vsel %vm267, %v278, %v280
    %v282 = vshll.u32 %v242, 8
    %v283 = vand.u32 %v282, 65535
    %v284 = vshrl.u32 %v282, 16
    %v285 = vand.u32 %v281, 65535
    %v286 = vshrl.u32 %v281, 16
    %v287 = vmul.u32 %v283, %v285
    %v288 = vmul.u32 %v283, %v286
    %v289 = vmul.u32 %v284, %v285
    %v290 = vmul.u32 %v284, %v286
    %v291 = vshll.u32 %v288, 16
    %v292 = vshrl.u32 %v288, 16
    %v293 = vshll.u32 %v289, 16
    %v294 = vshrl.u32 %v289, 16
    %vm295 = vc.u32 %v287, %v291
    %v296 = vsel %vm295, 1, 0
    %v297 = vadd.s32 %v287, %v291
    %v298 = vadd.s32 %v290, %v296
    %vm299 = vc.u32 %v297, %v293
    %v300 = vsel %vm299, 1, 0
    %v301 = vadd.s32 %v297, %v293
    %v302 = vadd.s32 %v298, %v300
    %v303 = vadd.s32 %v302, %v292
    %v304 = vadd.s32 %v303, %v294
    %v305 = vand.u32 %v282, 65535
    %v306 = vshrl.u32 %v282, 16
    %v307 = vand.u32 %v277, 65535
    %v308 = vshrl.u32 %v277, 16
    %v309 = vmul.u32 %v305, %v307
    %v310 = vmul.u32 %v305, %v308
    %v311 = vmul.u32 %v306, %v307
    %v312 = vmul.u32 %v306, %v308
    %v313 = vshll.u32 %v310, 16
    %v314 = vshrl.u32 %v310, 16
    %v315 = vshll.u32 %v311, 16
    %v316 = vshrl.u32 %v311, 16
    %vm317 = vc.u32 %v309, %v313
    %v318 = vsel %vm317, 1, 0
    %v319 = vadd.s32 %v309, %v313
    %v320 = vadd.s32 %v312, %v318
    %vm321 = vc.u32 %v319, %v315
    %v322 = vsel %vm321, 1, 0
    %v323 = vadd.s32 %v319, %v315
    %v324 = vadd.s32 %v320, %v322
    %v325 = vadd.s32 %v324, %v314
    %v326 = vadd.s32 %v325, %v316
    %v327 = vmul.u32 %v282, %v273
    %v328 = vadd.s32 %v304, %v323
    %vm329 = vc.u32 %v304, %v323
    %v330 = vadd.s32 %v326, 1
    %v331 = vsel %vm329, %v330, %v326
    %v332 = vadd.s32 %v327, %v331
    %v333 = vadd.s32 %v332, 536870912
    %v334 = vshrl.u32 %v333, 30
    %v335 = vshll.u32 %v334, 30
    %v336 = vsub.s32 %v332, %v335
    %vm337 = vcmp.lt.s32.totalorder %v336, 0
    %v338 = vsub.s32 0, %v336
    %v339 = vsel %vm337, %v338, %v336
    %v340 = vclz %v339
    %v341 = vsub.s32 %v340, 2
    %vm342 = vcmp.gt.s32.totalorder 0, %v341
    %v343 = vsel %vm342, 0, %v341
    %v344 = vsub.s32 32, %v343
    %v345 = vshll.u32 %v336, %v343
    %v346 = vshrl.u32 %v328, %v344
    %v347 = vor.u32 %v345, %v346
    %v348 = vsub.s32 4294967266, %v343
    %v349 = vadd.s32 %v348, 127
    %v350 = vshll.u32 %v349, 23
    %v351 = vor.u32 4788187, %v350
    %v352 = vand.u32 2147483647, %v351
    %v354 = vcvt.s32.f32 %v347
    %v355 = vmul.f32 %v354, %v352
    %v356 = vxor.u32 %v355, 2147483648
    %v357 = vsel %vm236, %v356, %v355
    %v358 = vsub.s32 4, %v334
    %v359 = vsel %vm236, %v358, %v334
    %v360 = vsel %vm235, %v77, %v357
    %v361 = vsel %vm235, 0, %v359
    %v362 = vmul.f32 %v360, %v360
    %v363 = vmul.f32 %v362, -0.001358992
    %v364 = vadd.f32 %v363, 0.041655596
    %v365 = vmul.f32 %v362, %v364
    %v366 = vadd.f32 %v365, -0.4999988
    %v367 = vmul.f32 %v362, %v366
    %v368 = vadd.f32 1.0, %v367
    %v369 = vmul.f32 %v360, %v360
    %v370 = vmul.f32 %v369, -0.00019511016
    %v371 = vadd.f32 %v370, 0.008332121
    %v372 = vmul.f32 %v369, %v371
    %v373 = vadd.f32 %v372, -0.16666654
    %v374 = vmul.f32 %v369, %v373
    %v375 = vadd.f32 %v374, 1.0
    %v376 = vmul.f32 %v375, %v360
    %vm377 = vweird.f32 %v77
    %v378 = vand.u32 %v361, 3
    %vm379 = vcmp.lt.s32.totalorder %v378, 2
    %vm380 = vcmp.eq.s32.totalorder %v378, 0
    %v381 = vxor.u32 %v376, 2147483648
    %v382 = vsel %vm380, %v368, %v381
    %vm383 = vcmp.eq.s32.totalorder %v378, 2
    %v384 = vxor.u32 %v368, 2147483648
    %v385 = vsel %vm383, %v384, %v376
    %v386 = vsel %vm379, %v382, %v385
    %v387 = vsel %vm377, nan, %v386
    %v388 = vand.u32 2147483647, %v78
    %vm389 = vcmp.le.f32.partialorder %v388, 0.7853982
    %vm390 = vcmp.lt.s32.totalorder %v78, 0
    %v391 = vand.u32 %v78, 2139095040
    %v392 = vshrl.u32 %v391, 23
    %v393 = vsub.s32 %v392, 127
    %v394 = vand.u32 2147483647, %v78
    %v395 = vand.u32 %v394, 8388607
    %v396 = vor.u32 %v395, 8388608
    %v397 = vsub.s32 0, %v396
    %v398 = vadd.s32 %v393, 1
    %vm399 = vcmp.gt.s32.totalorder %v398, 0
    %v400 = vsel %vm399, %v398, 0
    %v401 = vshrl.u32 %v400, 5
    %v402 = vand.u32 %v400, 31
    %v403 = vsub.s32 32, %v402
    %v404 = vshrl.u32 683565275, %v403
    %v405 = vshll.u32 683565275, %v402
    %v406 = vshrl.u32 2475754826, %v403
    %v407 = vor.u32 %v405, %v406
    %v408 = vshll.u32 2475754826, %v402
    %v409 = vshrl.u32 2131351028, %v403
    %v410 = vor.u32 %v408, %v409
    %v411 = vshll.u32 2131351028, %v402
    %v412 = vshrl.u32 2102212464, %v403
    %v413 = vor.u32 %v411, %v412
    %v414 = vshll.u32 2102212464, %v402
    %v415 = vshrl.u32 920167782, %v403
    %v416 = vor.u32 %v414, %v415
    %v417 = vshll.u32 920167782, %v402
    %v418 = vshrl.u32 1326507024, %v403
    %v419 = vor.u32 %v417, %v418
    %vm420 = vcmp.lt.s32.totalorder %v401, 1
    %vm421 = vcmp.lt.s32.totalorder %v401, 2
    %vm422 = vcmp.lt.s32.totalorder %v401, 3
    %vm423 = vcmp.lt.s32.totalorder %v401, 4
    %v424 = vsel %vm420, %v404, %v407
    %v425 = vsel %vm423, %v413, 2102212464
    %v426 = vsel %vm422, %v410, %v425
    %v427 = vsel %vm421, %v424, %v426
    %v428 = vsel %vm420, %v407, %v410
    %v429 = vsel %vm423, %v416, 920167782
    %v430 = vsel %vm422, %v413, %v429
    %v431 = vsel %vm421, %v428, %v430
    %v432 = vsel %vm420, %v410, %v413
    %v433 = vsel %vm423, %v419, 1326507024
    %v434 = vsel %vm422, %v416, %v433
    %v435 = vsel %vm421, %v432, %v434
    %v436 = vshll.u32 %v396, 8
    %v437 = vand.u32 %v436, 65535
    %v438 = vshrl.u32 %v436, 16
    %v439 = vand.u32 %v435, 65535
    %v440 = vshrl.u32 %v435, 16
    %v441 = vmul.u32 %v437, %v439
    %v442 = vmul.u32 %v437, %v440
    %v443 = vmul.u32 %v438, %v439
    %v444 = vmul.u32 %v438, %v440
    %v445 = vshll.u32 %v442, 16
    %v446 = vshrl.u32 %v442, 16
    %v447 = vshll.u32 %v443, 16
    %v448 = vshrl.u32 %v443, 16
    %vm449 = vc.u32 %v441, %v445
    %v450 = vsel %vm449, 1, 0
    %v451 = vadd.s32 %v441, %v445
    %v452 = vadd.s32 %v444, %v450
    %vm453 = vc.u32 %v451, %v447
    %v454 = vsel %vm453, 1, 0
    %v455 = vadd.s32 %v451, %v447
    %v456 = vadd.s32 %v452, %v454
    %v457 = vadd.s32 %v456, %v446
    %v458 = vadd.s32 %v457, %v448
    %v459 = vand.u32 %v436, 65535
    %v460 = vshrl.u32 %v436, 16
    %v461 = vand.u32 %v431, 65535
    %v462 = vshrl.u32 %v431, 16
    %v463 = vmul.u32 %v459, %v461
    %v464 = vmul.u32 %v459, %v462
    %v465 = vmul.u32 %v460, %v461
    %v466 = vmul.u32 %v460, %v462
    %v467 = vshll.u32 %v464, 16
    %v468 = vshrl.u32 %v464, 16
    %v469 = vshll.u32 %v465, 16
    %v470 = vshrl.u32 %v465, 16
    %vm471 = vc.u32 %v463, %v467
    %v472 = vsel %vm471, 1, 0
    %v473 = vadd.s32 %v463, %v467
    %v474 = vadd.s32 %v466, %v472
    %vm475 = vc.u32 %v473, %v469
    %v476 = vsel %vm475, 1, 0
    %v477 = vadd.s32 %v473, %v469
    %v478 = vadd.s32 %v474, %v476
    %v479 = vadd.s32 %v478, %v468
    %v480 = vadd.s32 %v479, %v470
    %v481 = vmul.u32 %v436, %v427
    %v482 = vadd.s32 %v458, %v477
    %vm483 = vc.u32 %v458, %v477
    %v484 = vadd.s32 %v480, 1
    %v485 = vsel %vm483, %v484, %v480
    %v486 = vadd.s32 %v481, %v485
    %v487 = vadd.s32 %v486, 536870912
    %v488 = vshrl.u32 %v487, 30
    %v489 = vshll.u32 %v488, 30
    %v490 = vsub.s32 %v486, %v489
    %vm491 = vcmp.lt.s32.totalorder %v490, 0
    %v492 = vsub.s32 0, %v490
    %v493 = vsel %vm491, %v492, %v490
    %v494 = vclz %v493
    %v495 = vsub.s32 %v494, 2
    %vm496 = vcmp.gt.s32.totalorder 0, %v495
    %v497 = vsel %vm496, 0, %v495
    %v498 = vsub.s32 32, %v497
    %v499 = vshll.u32 %v490, %v497
    %v500 = vshrl.u32 %v482, %v498
    %v501 = vor.u32 %v499, %v500
    %v502 = vsub.s32 4294967266, %v497
    %v503 = vadd.s32 %v502, 127
    %v504 = vshll.u32 %v503, 23
    %v505 = vor.u32 4788187, %v504
    %v506 = vand.u32 2147483647, %v505
    %v508 = vcvt.s32.f32 %v501
    %v509 = vmul.f32 %v508, %v506
    %v510 = vxor.u32 %v509, 2147483648
    %v511 = vsel %vm390, %v510, %v509
    %v512 = vsub.s32 4, %v488
    %v513 = vsel %vm390, %v512, %v488
    %v514 = vsel %vm389, %v78, %v511
    %v515 = vsel %vm389, 0, %v513
    %v516 = vmul.f32 %v514, %v514
    %v517 = vmul.f32 %v516, -0.001358992
    %v518 = vadd.f32 %v517, 0.041655596
    %v519 = vmul.f32 %v516, %v518
    %v520 = vadd.f32 %v519, -0.4999988
    %v521 = vmul.f32 %v516, %v520
    %v522 = vadd.f32 1.0, %v521
    %v523 = vmul.f32 %v514, %v514
    %v524 = vmul.f32 %v523, -0.00019511016
    %v525 = vadd.f32 %v524, 0.008332121
    %v526 = vmul.f32 %v523, %v525
    %v527 = vadd.f32 %v526, -0.16666654
    %v528 = vmul.f32 %v523, %v527
    %v529 = vadd.f32 %v528, 1.0
    %v530 = vmul.f32 %v529, %v514
    %vm531 = vweird.f32 %v78
    %v532 = vand.u32 %v515, 3
    %vm533 = vcmp.lt.s32.totalorder %v532, 2
    %vm534 = vcmp.eq.s32.totalorder %v532, 0
    %v535 = vxor.u32 %v530, 2147483648
    %v536 = vsel %vm534, %v522, %v535
    %vm537 = vcmp.eq.s32.totalorder %v532, 2
    %v538 = vxor.u32 %v522, 2147483648
    %v539 = vsel %vm537, %v538, %v530
    %v540 = vsel %vm533, %v536, %v539
    %v541 = vsel %vm531, nan, %v540
    %v542 = vand.u32 2147483647, %v79
    %vm543 = vcmp.le.f32.partialorder %v542, 0.7853982
    %vm544 = vcmp.lt.s32.totalorder %v79, 0
    %v545 = vand.u32 %v79, 2139095040
    %v546 = vshrl.u32 %v545, 23
    %v547 = vsub.s32 %v546, 127
    %v548 = vand.u32 2147483647, %v79
    %v549 = vand.u32 %v548, 8388607
    %v550 = vor.u32 %v549, 8388608
    %v551 = vsub.s32 0, %v550
    %v552 = vadd.s32 %v547, 1
    %vm553 = vcmp.gt.s32.totalorder %v552, 0
    %v554 = vsel %vm553, %v552, 0
    %v555 = vshrl.u32 %v554, 5
    %v556 = vand.u32 %v554, 31
    %v557 = vsub.s32 32, %v556
    %v558 = vshrl.u32 683565275, %v557
    %v559 = vshll.u32 683565275, %v556
    %v560 = vshrl.u32 2475754826, %v557
    %v561 = vor.u32 %v559, %v560
    %v562 = vshll.u32 2475754826, %v556
    %v563 = vshrl.u32 2131351028, %v557
    %v564 = vor.u32 %v562, %v563
    %v565 = vshll.u32 2131351028, %v556
    %v566 = vshrl.u32 2102212464, %v557
    %v567 = vor.u32 %v565, %v566
    %v568 = vshll.u32 2102212464, %v556
    %v569 = vshrl.u32 920167782, %v557
    %v570 = vor.u32 %v568, %v569
    %v571 = vshll.u32 920167782, %v556
    %v572 = vshrl.u32 1326507024, %v557
    %v573 = vor.u32 %v571, %v572
    %vm574 = vcmp.lt.s32.totalorder %v555, 1
    %vm575 = vcmp.lt.s32.totalorder %v555, 2
    %vm576 = vcmp.lt.s32.totalorder %v555, 3
    %vm577 = vcmp.lt.s32.totalorder %v555, 4
    %v578 = vsel %vm574, %v558, %v561
    %v579 = vsel %vm577, %v567, 2102212464
    %v580 = vsel %vm576, %v564, %v579
    %v581 = vsel %vm575, %v578, %v580
    %v582 = vsel %vm574, %v561, %v564
    %v583 = vsel %vm577, %v570, 920167782
    %v584 = vsel %vm576, %v567, %v583
    %v585 = vsel %vm575, %v582, %v584
    %v586 = vsel %vm574, %v564, %v567
    %v587 = vsel %vm577, %v573, 1326507024
    %v588 = vsel %vm576, %v570, %v587
    %v589 = vsel %vm575, %v586, %v588
    %v590 = vshll.u32 %v550, 8
    %v591 = vand.u32 %v590, 65535
    %v592 = vshrl.u32 %v590, 16
    %v593 = vand.u32 %v589, 65535
    %v594 = vshrl.u32 %v589, 16
    %v595 = vmul.u32 %v591, %v593
    %v596 = vmul.u32 %v591, %v594
    %v597 = vmul.u32 %v592, %v593
    %v598 = vmul.u32 %v592, %v594
    %v599 = vshll.u32 %v596, 16
    %v600 = vshrl.u32 %v596, 16
    %v601 = vshll.u32 %v597, 16
    %v602 = vshrl.u32 %v597, 16
    %vm603 = vc.u32 %v595, %v599
    %v604 = vsel %vm603, 1, 0
    %v605 = vadd.s32 %v595, %v599
    %v606 = vadd.s32 %v598, %v604
    %vm607 = vc.u32 %v605, %v601
    %v608 = vsel %vm607, 1, 0
    %v609 = vadd.s32 %v605, %v601
    %v610 = vadd.s32 %v606, %v608
    %v611 = vadd.s32 %v610, %v600
    %v612 = vadd.s32 %v611, %v602
    %v613 = vand.u32 %v590, 65535
    %v614 = vshrl.u32 %v590, 16
    %v615 = vand.u32 %v585, 65535
    %v616 = vshrl.u32 %v585, 16
    %v617 = vmul.u32 %v613, %v615
    %v618 = vmul.u32 %v613, %v616
    %v619 = vmul.u32 %v614, %v615
    %v620 = vmul.u32 %v614, %v616
    %v621 = vshll.u32 %v618, 16
    %v622 = vshrl.u32 %v618, 16
    %v623 = vshll.u32 %v619, 16
    %v624 = vshrl.u32 %v619, 16
    %vm625 = vc.u32 %v617, %v621
    %v626 = vsel %vm625, 1, 0
    %v627 = vadd.s32 %v617, %v621
    %v628 = vadd.s32 %v620, %v626
    %vm629 = vc.u32 %v627, %v623
    %v630 = vsel %vm629, 1, 0
    %v631 = vadd.s32 %v627, %v623
    %v632 = vadd.s32 %v628, %v630
    %v633 = vadd.s32 %v632, %v622
    %v634 = vadd.s32 %v633, %v624
    %v635 = vmul.u32 %v590, %v581
    %v636 = vadd.s32 %v612, %v631
    %vm637 = vc.u32 %v612, %v631
    %v638 = vadd.s32 %v634, 1
    %v639 = vsel %vm637, %v638, %v634
    %v640 = vadd.s32 %v635, %v639
    %v641 = vadd.s32 %v640, 536870912
    %v642 = vshrl.u32 %v641, 30
    %v643 = vshll.u32 %v642, 30
    %v644 = vsub.s32 %v640, %v643
    %vm645 = vcmp.lt.s32.totalorder %v644, 0
    %v646 = vsub.s32 0, %v644
    %v647 = vsel %vm645, %v646, %v644
    %v648 = vclz %v647
    %v649 = vsub.s32 %v648, 2
    %vm650 = vcmp.gt.s32.totalorder 0, %v649
    %v651 = vsel %vm650, 0, %v649
    %v652 = vsub.s32 32, %v651
    %v653 = vshll.u32 %v644, %v651
    %v654 = vshrl.u32 %v636, %v652
    %v655 = vor.u32 %v653, %v654
    %v656 = vsub.s32 4294967266, %v651
    %v657 = vadd.s32 %v656, 127
    %v658 = vshll.u32 %v657, 23
    %v659 = vor.u32 4788187, %v658
    %v660 = vand.u32 2147483647, %v659
    %v662 = vcvt.s32.f32 %v655
    %v663 = vmul.f32 %v662, %v660
    %v664 = vxor.u32 %v663, 2147483648
    %v665 = vsel %vm544, %v664, %v663
    %v666 = vsub.s32 4, %v642
    %v667 = vsel %vm544, %v666, %v642
    %v668 = vsel %vm543, %v79, %v665
    %v669 = vsel %vm543, 0, %v667
    %v670 = vmul.f32 %v668, %v668
    %v671 = vmul.f32 %v670, -0.001358992
    %v672 = vadd.f32 %v671, 0.041655596
    %v673 = vmul.f32 %v670, %v672
    %v674 = vadd.f32 %v673, -0.4999988
    %v675 = vmul.f32 %v670, %v674
    %v676 = vadd.f32 1.0, %v675
    %v677 = vmul.f32 %v668, %v668
    %v678 = vmul.f32 %v677, -0.00019511016
    %v679 = vadd.f32 %v678, 0.008332121
    %v680 = vmul.f32 %v677, %v679
    %v681 = vadd.f32 %v680, -0.16666654
    %v682 = vmul.f32 %v677, %v681
    %v683 = vadd.f32 %v682, 1.0
    %v684 = vmul.f32 %v683, %v668
    %vm685 = vweird.f32 %v79
    %v686 = vand.u32 %v669, 3
    %vm687 = vcmp.lt.s32.totalorder %v686, 2
    %vm688 = vcmp.eq.s32.totalorder %v686, 0
    %v689 = vxor.u32 %v684, 2147483648
    %v690 = vsel %vm688, %v676, %v689
    %vm691 = vcmp.eq.s32.totalorder %v686, 2
    %v692 = vxor.u32 %v676, 2147483648
    %v693 = vsel %vm691, %v692, %v684
    %v694 = vsel %vm687, %v690, %v693
    %v695 = vsel %vm685, nan, %v694
    %v696 = vand.u32 2147483647, %v76
    %vm697 = vcmp.le.f32.partialorder %v696, 0.7853982
    %vm698 = vcmp.lt.s32.totalorder %v76, 0
    %v699 = vand.u32 %v76, 2139095040
    %v700 = vshrl.u32 %v699, 23
    %v701 = vsub.s32 %v700, 127
    %v702 = vand.u32 2147483647, %v76
    %v703 = vand.u32 %v702, 8388607
    %v704 = vor.u32 %v703, 8388608
    %v705 = vsub.s32 0, %v704
    %v706 = vadd.s32 %v701, 1
    %vm707 = vcmp.gt.s32.totalorder %v706, 0
    %v708 = vsel %vm707, %v706, 0
    %v709 = vshrl.u32 %v708, 5
    %v710 = vand.u32 %v708, 31
    %v711 = vsub.s32 32, %v710
    %v712 = vshrl.u32 683565275, %v711
    %v713 = vshll.u32 683565275, %v710
    %v714 = vshrl.u32 2475754826, %v711
    %v715 = vor.u32 %v713, %v714
    %v716 = vshll.u32 2475754826, %v710
    %v717 = vshrl.u32 2131351028, %v711
    %v718 = vor.u32 %v716, %v717
    %v719 = vshll.u32 2131351028, %v710
    %v720 = vshrl.u32 2102212464, %v711
    %v721 = vor.u32 %v719, %v720
    %v722 = vshll.u32 2102212464, %v710
    %v723 = vshrl.u32 920167782, %v711
    %v724 = vor.u32 %v722, %v723
    %v725 = vshll.u32 920167782, %v710
    %v726 = vshrl.u32 1326507024, %v711
    %v727 = vor.u32 %v725, %v726
    %vm728 = vcmp.lt.s32.totalorder %v709, 1
    %vm729 = vcmp.lt.s32.totalorder %v709, 2
    %vm730 = vcmp.lt.s32.totalorder %v709, 3
    %vm731 = vcmp.lt.s32.totalorder %v709, 4
    %v732 = vsel %vm728, %v712, %v715
    %v733 = vsel %vm731, %v721, 2102212464
    %v734 = vsel %vm730, %v718, %v733
    %v735 = vsel %vm729, %v732, %v734
    %v736 = vsel %vm728, %v715, %v718
    %v737 = vsel %vm731, %v724, 920167782
    %v738 = vsel %vm730, %v721, %v737
    %v739 = vsel %vm729, %v736, %v738
    %v740 = vsel %vm728, %v718, %v721
    %v741 = vsel %vm731, %v727, 1326507024
    %v742 = vsel %vm730, %v724, %v741
    %v743 = vsel %vm729, %v740, %v742
    %v744 = vshll.u32 %v704, 8
    %v745 = vand.u32 %v744, 65535
    %v746 = vshrl.u32 %v744, 16
    %v747 = vand.u32 %v743, 65535
    %v748 = vshrl.u32 %v743, 16
    %v749 = vmul.u32 %v745, %v747
    %v750 = vmul.u32 %v745, %v748
    %v751 = vmul.u32 %v746, %v747
    %v752 = vmul.u32 %v746, %v748
    %v753 = vshll.u32 %v750, 16
    %v754 = vshrl.u32 %v750, 16
    %v755 = vshll.u32 %v751, 16
    %v756 = vshrl.u32 %v751, 16
    %vm757 = vc.u32 %v749, %v753
    %v758 = vsel %vm757, 1, 0
    %v759 = vadd.s32 %v749, %v753
    %v760 = vadd.s32 %v752, %v758
    %vm761 = vc.u32 %v759, %v755
    %v762 = vsel %vm761, 1, 0
    %v763 = vadd.s32 %v759, %v755
    %v764 = vadd.s32 %v760, %v762
    %v765 = vadd.s32 %v764, %v754
    %v766 = vadd.s32 %v765, %v756
    %v767 = vand.u32 %v744, 65535
    %v768 = vshrl.u32 %v744, 16
    %v769 = vand.u32 %v739, 65535
    %v770 = vshrl.u32 %v739, 16
    %v771 = vmul.u32 %v767, %v769
    %v772 = vmul.u32 %v767, %v770
    %v773 = vmul.u32 %v768, %v769
    %v774 = vmul.u32 %v768, %v770
    %v775 = vshll.u32 %v772, 16
    %v776 = vshrl.u32 %v772, 16
    %v777 = vshll.u32 %v773, 16
    %v778 = vshrl.u32 %v773, 16
    %vm779 = vc.u32 %v771, %v775
    %v780 = vsel %vm779, 1, 0
    %v781 = vadd.s32 %v771, %v775
    %v782 = vadd.s32 %v774, %v780
    %vm783 = vc.u32 %v781, %v777
    %v784 = vsel %vm783, 1, 0
    %v785 = vadd.s32 %v781, %v777
    %v786 = vadd.s32 %v782, %v784
    %v787 = vadd.s32 %v786, %v776
    %v788 = vadd.s32 %v787, %v778
    %v789 = vmul.u32 %v744, %v735
    %v790 = vadd.s32 %v766, %v785
    %vm791 = vc.u32 %v766, %v785
    %v792 = vadd.s32 %v788, 1
    %v793 = vsel %vm791, %v792, %v788
    %v794 = vadd.s32 %v789, %v793
    %v795 = vadd.s32 %v794, 536870912
    %v796 = vshrl.u32 %v795, 30
    %v797 = vshll.u32 %v796, 30
    %v798 = vsub.s32 %v794, %v797
    %vm799 = vcmp.lt.s32.totalorder %v798, 0
    %v800 = vsub.s32 0, %v798
    %v801 = vsel %vm799, %v800, %v798
    %v802 = vclz %v801
    %v803 = vsub.s32 %v802, 2
    %vm804 = vcmp.gt.s32.totalorder 0, %v803
    %v805 = vsel %vm804, 0, %v803
    %v806 = vsub.s32 32, %v805
    %v807 = vshll.u32 %v798, %v805
    %v808 = vshrl.u32 %v790, %v806
    %v809 = vor.u32 %v807, %v808
    %v810 = vsub.s32 4294967266, %v805
    %v811 = vadd.s32 %v810, 127
    %v812 = vshll.u32 %v811, 23
    %v813 = vor.u32 4788187, %v812
    %v814 = vand.u32 2147483647, %v813
    %v816 = vcvt.s32.f32 %v809
    %v817 = vmul.f32 %v816, %v814
    %v818 = vxor.u32 %v817, 2147483648
    %v819 = vsel %vm698, %v818, %v817
    %v820 = vsub.s32 4, %v796
    %v821 = vsel %vm698, %v820, %v796
    %v822 = vsel %vm697, %v76, %v819
    %v823 = vsel %vm697, 0, %v821
    %v824 = vmul.f32 %v822, %v822
    %v825 = vmul.f32 %v824, -0.001358992
    %v826 = vadd.f32 %v825, 0.041655596
    %v827 = vmul.f32 %v824, %v826
    %v828 = vadd.f32 %v827, -0.4999988
    %v829 = vmul.f32 %v824, %v828
    %v830 = vadd.f32 1.0, %v829
    %v831 = vmul.f32 %v822, %v822
    %v832 = vmul.f32 %v831, -0.00019511016
    %v833 = vadd.f32 %v832, 0.008332121
    %v834 = vmul.f32 %v831, %v833
    %v835 = vadd.f32 %v834, -0.16666654
    %v836 = vmul.f32 %v831, %v835
    %v837 = vadd.f32 %v836, 1.0
    %v838 = vmul.f32 %v837, %v822
    %vm839 = vweird.f32 %v76
    %v840 = vadd.s32 %v823, 3
    %v841 = vand.u32 %v840, 3
    %vm842 = vcmp.lt.s32.totalorder %v841, 2
    %vm843 = vcmp.eq.s32.totalorder %v841, 0
    %v844 = vxor.u32 %v838, 2147483648
    %v845 = vsel %vm843, %v830, %v844
    %vm846 = vcmp.eq.s32.totalorder %v841, 2
    %v847 = vxor.u32 %v830, 2147483648
    %v848 = vsel %vm846, %v847, %v838
    %v849 = vsel %vm842, %v845, %v848
    %v850 = vsel %vm839, nan, %v849
    %v851 = vand.u32 2147483647, %v77
    %vm852 = vcmp.le.f32.partialorder %v851, 0.7853982
    %vm853 = vcmp.lt.s32.totalorder %v77, 0
    %v854 = vand.u32 %v77, 2139095040
    %v855 = vshrl.u32 %v854, 23
    %v856 = vsub.s32 %v855, 127
    %v857 = vand.u32 2147483647, %v77
    %v858 = vand.u32 %v857, 8388607
    %v859 = vor.u32 %v858, 8388608
    %v860 = vsub.s32 0, %v859
    %v861 = vadd.s32 %v856, 1
    %vm862 = vcmp.gt.s32.totalorder %v861, 0
    %v863 = vsel %vm862, %v861, 0
    %v864 = vshrl.u32 %v863, 5
    %v865 = vand.u32 %v863, 31
    %v866 = vsub.s32 32, %v865
    %v867 = vshrl.u32 683565275, %v866
    %v868 = vshll.u32 683565275, %v865
    %v869 = vshrl.u32 2475754826, %v866
    %v870 = vor.u32 %v868, %v869
    %v871 = vshll.u32 2475754826, %v865
    %v872 = vshrl.u32 2131351028, %v866
    %v873 = vor.u32 %v871, %v872
    %v874 = vshll.u32 2131351028, %v865
    %v875 = vshrl.u32 2102212464, %v866
    %v876 = vor.u32 %v874, %v875
    %v877 = vshll.u32 2102212464, %v865
    %v878 = vshrl.u32 920167782, %v866
    %v879 = vor.u32 %v877, %v878
    %v880 = vshll.u32 920167782, %v865
    %v881 = vshrl.u32 1326507024, %v866
    %v882 = vor.u32 %v880, %v881
    %vm883 = vcmp.lt.s32.totalorder %v864, 1
    %vm884 = vcmp.lt.s32.totalorder %v864, 2
    %vm885 = vcmp.lt.s32.totalorder %v864, 3
    %vm886 = vcmp.lt.s32.totalorder %v864, 4
    %v887 = vsel %vm883, %v867, %v870
    %v888 = vsel %vm886, %v876, 2102212464
    %v889 = vsel %vm885, %v873, %v888
    %v890 = vsel %vm884, %v887, %v889
    %v891 = vsel %vm883, %v870, %v873
    %v892 = vsel %vm886, %v879, 920167782
    %v893 = vsel %vm885, %v876, %v892
    %v894 = vsel %vm884, %v891, %v893
    %v895 = vsel %vm883, %v873, %v876
    %v896 = vsel %vm886, %v882, 1326507024
    %v897 = vsel %vm885, %v879, %v896
    %v898 = vsel %vm884, %v895, %v897
    %v899 = vshll.u32 %v859, 8
    %v900 = vand.u32 %v899, 65535
    %v901 = vshrl.u32 %v899, 16
    %v902 = vand.u32 %v898, 65535
    %v903 = vshrl.u32 %v898, 16
    %v904 = vmul.u32 %v900, %v902
    %v905 = vmul.u32 %v900, %v903
    %v906 = vmul.u32 %v901, %v902
    %v907 = vmul.u32 %v901, %v903
    %v908 = vshll.u32 %v905, 16
    %v909 = vshrl.u32 %v905, 16
    %v910 = vshll.u32 %v906, 16
    %v911 = vshrl.u32 %v906, 16
    %vm912 = vc.u32 %v904, %v908
    %v913 = vsel %vm912, 1, 0
    %v914 = vadd.s32 %v904, %v908
    %v915 = vadd.s32 %v907, %v913
    %vm916 = vc.u32 %v914, %v910
    %v917 = vsel %vm916, 1, 0
    %v918 = vadd.s32 %v914, %v910
    %v919 = vadd.s32 %v915, %v917
    %v920 = vadd.s32 %v919, %v909
    %v921 = vadd.s32 %v920, %v911
    %v922 = vand.u32 %v899, 65535
    %v923 = vshrl.u32 %v899, 16
    %v924 = vand.u32 %v894, 65535
    %v925 = vshrl.u32 %v894, 16
    %v926 = vmul.u32 %v922, %v924
    %v927 = vmul.u32 %v922, %v925
    %v928 = vmul.u32 %v923, %v924
    %v929 = vmul.u32 %v923, %v925
    %v930 = vshll.u32 %v927, 16
    %v931 = vshrl.u32 %v927, 16
    %v932 = vshll.u32 %v928, 16
    %v933 = vshrl.u32 %v928, 16
    %vm934 = vc.u32 %v926, %v930
    %v935 = vsel %vm934, 1, 0
    %v936 = vadd.s32 %v926, %v930
    %v937 = vadd.s32 %v929, %v935
    %vm938 = vc.u32 %v936, %v932
    %v939 = vsel %vm938, 1, 0
    %v940 = vadd.s32 %v936, %v932
    %v941 = vadd.s32 %v937, %v939
    %v942 = vadd.s32 %v941, %v931
    %v943 = vadd.s32 %v942, %v933
    %v944 = vmul.u32 %v899, %v890
    %v945 = vadd.s32 %v921, %v940
    %vm946 = vc.u32 %v921, %v940
    %v947 = vadd.s32 %v943, 1
    %v948 = vsel %vm946, %v947, %v943
    %v949 = vadd.s32 %v944, %v948
    %v950 = vadd.s32 %v949, 536870912
    %v951 = vshrl.u32 %v950, 30
    %v952 = vshll.u32 %v951, 30
    %v953 = vsub.s32 %v949, %v952
    %vm954 = vcmp.lt.s32.totalorder %v953, 0
    %v955 = vsub.s32 0, %v953
    %v956 = vsel %vm954, %v955, %v953
    %v957 = vclz %v956
    %v958 = vsub.s32 %v957, 2
    %vm959 = vcmp.gt.s32.totalorder 0, %v958
    %v960 = vsel %vm959, 0, %v958
    %v961 = vsub.s32 32, %v960
    %v962 = vshll.u32 %v953, %v960
    %v963 = vshrl.u32 %v945, %v961
    %v964 = vor.u32 %v962, %v963
    %v965 = vsub.s32 4294967266, %v960
    %v966 = vadd.s32 %v965, 127
    %v967 = vshll.u32 %v966, 23
    %v968 = vor.u32 4788187, %v967
    %v969 = vand.u32 2147483647, %v968
    %v971 = vcvt.s32.f32 %v964
    %v972 = vmul.f32 %v971, %v969
    %v973 = vxor.u32 %v972, 2147483648
    %v974 = vsel %vm853, %v973, %v972
    %v975 = vsub.s32 4, %v951
    %v976 = vsel %vm853, %v975, %v951
    %v977 = vsel %vm852, %v77, %v974
    %v978 = vsel %vm852, 0, %v976
    %v979 = vmul.f32 %v977, %v977
    %v980 = vmul.f32 %v979, -0.001358992
    %v981 = vadd.f32 %v980, 0.041655596
    %v982 = vmul.f32 %v979, %v981
    %v983 = vadd.f32 %v982, -0.4999988
    %v984 = vmul.f32 %v979, %v983
    %v985 = vadd.f32 1.0, %v984
    %v986 = vmul.f32 %v977, %v977
    %v987 = vmul.f32 %v986, -0.00019511016
    %v988 = vadd.f32 %v987, 0.008332121
    %v989 = vmul.f32 %v986, %v988
    %v990 = vadd.f32 %v989, -0.16666654
    %v991 = vmul.f32 %v986, %v990
    %v992 = vadd.f32 %v991, 1.0
    %v993 = vmul.f32 %v992, %v977
    %vm994 = vweird.f32 %v77
    %v995 = vadd.s32 %v978, 3
    %v996 = vand.u32 %v995, 3
    %vm997 = vcmp.lt.s32.totalorder %v996, 2
    %vm998 = vcmp.eq.s32.totalorder %v996, 0
    %v999 = vxor.u32 %v993, 2147483648
    %v1000 = vsel %vm998, %v985, %v999
    %vm1001 = vcmp.eq.s32.totalorder %v996, 2
    %v1002 = vxor.u32 %v985, 2147483648
    %v1003 = vsel %vm1001, %v1002, %v993
    %v1004 = vsel %vm997, %v1000, %v1003
    %v1005 = vsel %vm994, nan, %v1004
    %v1006 = vand.u32 2147483647, %v78
    %vm1007 = vcmp.le.f32.partialorder %v1006, 0.7853982
    %vm1008 = vcmp.lt.s32.totalorder %v78, 0
    %v1009 = vand.u32 %v78, 2139095040
    %v1010 = vshrl.u32 %v1009, 23
    %v1011 = vsub.s32 %v1010, 127
    %v1012 = vand.u32 2147483647, %v78
    %v1013 = vand.u32 %v1012, 8388607
    %v1014 = vor.u32 %v1013, 8388608
    %v1015 = vsub.s32 0, %v1014
    %v1016 = vadd.s32 %v1011, 1
    %vm1017 = vcmp.gt.s32.totalorder %v1016, 0
    %v1018 = vsel %vm1017, %v1016, 0
    %v1019 = vshrl.u32 %v1018, 5
    %v1020 = vand.u32 %v1018, 31
    %v1021 = vsub.s32 32, %v1020
    %v1022 = vshrl.u32 683565275, %v1021
    %v1023 = vshll.u32 683565275, %v1020
    %v1024 = vshrl.u32 2475754826, %v1021
    %v1025 = vor.u32 %v1023, %v1024
    %v1026 = vshll.u32 2475754826, %v1020
    %v1027 = vshrl.u32 2131351028, %v1021
    %v1028 = vor.u32 %v1026, %v1027
    %v1029 = vshll.u32 2131351028, %v1020
    %v1030 = vshrl.u32 2102212464, %v1021
    %v1031 = vor.u32 %v1029, %v1030
    %v1032 = vshll.u32 2102212464, %v1020
    %v1033 = vshrl.u32 920167782, %v1021
    %v1034 = vor.u32 %v1032, %v1033
    %v1035 = vshll.u32 920167782, %v1020
    %v1036 = vshrl.u32 1326507024, %v1021
    %v1037 = vor.u32 %v1035, %v1036
    %vm1038 = vcmp.lt.s32.totalorder %v1019, 1
    %vm1039 = vcmp.lt.s32.totalorder %v1019, 2
    %vm1040 = vcmp.lt.s32.totalorder %v1019, 3
    %vm1041 = vcmp.lt.s32.totalorder %v1019, 4
    %v1042 = vsel %vm1038, %v1022, %v1025
    %v1043 = vsel %vm1041, %v1031, 2102212464
    %v1044 = vsel %vm1040, %v1028, %v1043
    %v1045 = vsel %vm1039, %v1042, %v1044
    %v1046 = vsel %vm1038, %v1025, %v1028
    %v1047 = vsel %vm1041, %v1034, 920167782
    %v1048 = vsel %vm1040, %v1031, %v1047
    %v1049 = vsel %vm1039, %v1046, %v1048
    %v1050 = vsel %vm1038, %v1028, %v1031
    %v1051 = vsel %vm1041, %v1037, 1326507024
    %v1052 = vsel %vm1040, %v1034, %v1051
    %v1053 = vsel %vm1039, %v1050, %v1052
    %v1054 = vshll.u32 %v1014, 8
    %v1055 = vand.u32 %v1054, 65535
    %v1056 = vshrl.u32 %v1054, 16
    %v1057 = vand.u32 %v1053, 65535
    %v1058 = vshrl.u32 %v1053, 16
    %v1059 = vmul.u32 %v1055, %v1057
    %v1060 = vmul.u32 %v1055, %v1058
    %v1061 = vmul.u32 %v1056, %v1057
    %v1062 = vmul.u32 %v1056, %v1058
    %v1063 = vshll.u32 %v1060, 16
    %v1064 = vshrl.u32 %v1060, 16
    %v1065 = vshll.u32 %v1061, 16
    %v1066 = vshrl.u32 %v1061, 16
    %vm1067 = vc.u32 %v1059, %v1063
    %v1068 = vsel %vm1067, 1, 0
    %v1069 = vadd.s32 %v1059, %v1063
    %v1070 = vadd.s32 %v1062, %v1068
    %vm1071 = vc.u32 %v1069, %v1065
    %v1072 = vsel %vm1071, 1, 0
    %v1073 = vadd.s32 %v1069, %v1065
    %v1074 = vadd.s32 %v1070, %v1072
    %v1075 = vadd.s32 %v1074, %v1064
    %v1076 = vadd.s32 %v1075, %v1066
    %v1077 = vand.u32 %v1054, 65535
    %v1078 = vshrl.u32 %v1054, 16
    %v1079 = vand.u32 %v1049, 65535
    %v1080 = vshrl.u32 %v1049, 16
    %v1081 = vmul.u32 %v1077, %v1079
    %v1082 = vmul.u32 %v1077, %v1080
    %v1083 = vmul.u32 %v1078, %v1079
    %v1084 = vmul.u32 %v1078, %v1080
    %v1085 = vshll.u32 %v1082, 16
    %v1086 = vshrl.u32 %v1082, 16
    %v1087 = vshll.u32 %v1083, 16
    %v1088 = vshrl.u32 %v1083, 16
    %vm1089 = vc.u32 %v1081, %v1085
    %v1090 = vsel %vm1089, 1, 0
    %v1091 = vadd.s32 %v1081, %v1085
    %v1092 = vadd.s32 %v1084, %v1090
    %vm1093 = vc.u32 %v1091, %v1087
    %v1094 = vsel %vm1093, 1, 0
    %v1095 = vadd.s32 %v1091, %v1087
    %v1096 = vadd.s32 %v1092, %v1094
    %v1097 = vadd.s32 %v1096, %v1086
    %v1098 = vadd.s32 %v1097, %v1088
    %v1099 = vmul.u32 %v1054, %v1045
    %v1100 = vadd.s32 %v1076, %v1095
    %vm1101 = vc.u32 %v1076, %v1095
    %v1102 = vadd.s32 %v1098, 1
    %v1103 = vsel %vm1101, %v1102, %v1098
    %v1104 = vadd.s32 %v1099, %v1103
    %v1105 = vadd.s32 %v1104, 536870912
    %v1106 = vshrl.u32 %v1105, 30
    %v1107 = vshll.u32 %v1106, 30
    %v1108 = vsub.s32 %v1104, %v1107
    %vm1109 = vcmp.lt.s32.totalorder %v1108, 0
    %v1110 = vsub.s32 0, %v1108
    %v1111 = vsel %vm1109, %v1110, %v1108
    %v1112 = vclz %v1111
    %v1113 = vsub.s32 %v1112, 2
    %vm1114 = vcmp.gt.s32.totalorder 0, %v1113
    %v1115 = vsel %vm1114, 0, %v1113
    %v1116 = vsub.s32 32, %v1115
    %v1117 = vshll.u32 %v1108, %v1115
    %v1118 = vshrl.u32 %v1100, %v1116
    %v1119 = vor.u32 %v1117, %v1118
    %v1120 = vsub.s32 4294967266, %v1115
    %v1121 = vadd.s32 %v1120, 127
    %v1122 = vshll.u32 %v1121, 23
    %v1123 = vor.u32 4788187, %v1122
    %v1124 = vand.u32 2147483647, %v1123
    %v1126 = vcvt.s32.f32 %v1119
    %v1127 = vmul.f32 %v1126, %v1124
    %v1128 = vxor.u32 %v1127, 2147483648
    %v1129 = vsel %vm1008, %v1128, %v1127
    %v1130 = vsub.s32 4, %v1106
    %v1131 = vsel %vm1008, %v1130, %v1106
    %v1132 = vsel %vm1007, %v78, %v1129
    %v1133 = vsel %vm1007, 0, %v1131
    %v1134 = vmul.f32 %v1132, %v1132
    %v1135 = vmul.f32 %v1134, -0.001358992
    %v1136 = vadd.f32 %v1135, 0.041655596
    %v1137 = vmul.f32 %v1134, %v1136
    %v1138 = vadd.f32 %v1137, -0.4999988
    %v1139 = vmul.f32 %v1134, %v1138
    %v1140 = vadd.f32 1.0, %v1139
    %v1141 = vmul.f32 %v1132, %v1132
    %v1142 = vmul.f32 %v1141, -0.00019511016
    %v1143 = vadd.f32 %v1142, 0.008332121
    %v1144 = vmul.f32 %v1141, %v1143
    %v1145 = vadd.f32 %v1144, -0.16666654
    %v1146 = vmul.f32 %v1141, %v1145
    %v1147 = vadd.f32 %v1146, 1.0
    %v1148 = vmul.f32 %v1147, %v1132
    %vm1149 = vweird.f32 %v78
    %v1150 = vadd.s32 %v1133, 3
    %v1151 = vand.u32 %v1150, 3
    %vm1152 = vcmp.lt.s32.totalorder %v1151, 2
    %vm1153 = vcmp.eq.s32.totalorder %v1151, 0
    %v1154 = vxor.u32 %v1148, 2147483648
    %v1155 = vsel %vm1153, %v1140, %v1154
    %vm1156 = vcmp.eq.s32.totalorder %v1151, 2
    %v1157 = vxor.u32 %v1140, 2147483648
    %v1158 = vsel %vm1156, %v1157, %v1148
    %v1159 = vsel %vm1152, %v1155, %v1158
    %v1160 = vsel %vm1149, nan, %v1159
    %v1161 = vand.u32 2147483647, %v79
    %vm1162 = vcmp.le.f32.partialorder %v1161, 0.7853982
    %vm1163 = vcmp.lt.s32.totalorder %v79, 0
    %v1164 = vand.u32 %v79, 2139095040
    %v1165 = vshrl.u32 %v1164, 23
    %v1166 = vsub.s32 %v1165, 127
    %v1167 = vand.u32 2147483647, %v79
    %v1168 = vand.u32 %v1167, 8388607
    %v1169 = vor.u32 %v1168, 8388608
    %v1170 = vsub.s32 0, %v1169
    %v1171 = vadd.s32 %v1166, 1
    %vm1172 = vcmp.gt.s32.totalorder %v1171, 0
    %v1173 = vsel %vm1172, %v1171, 0
    %v1174 = vshrl.u32 %v1173, 5
    %v1175 = vand.u32 %v1173, 31
    %v1176 = vsub.s32 32, %v1175
    %v1177 = vshrl.u32 683565275, %v1176
    %v1178 = vshll.u32 683565275, %v1175
    %v1179 = vshrl.u32 2475754826, %v1176
    %v1180 = vor.u32 %v1178, %v1179
    %v1181 = vshll.u32 2475754826, %v1175
    %v1182 = vshrl.u32 2131351028, %v1176
    %v1183 = vor.u32 %v1181, %v1182
    %v1184 = vshll.u32 2131351028, %v1175
    %v1185 = vshrl.u32 2102212464, %v1176
    %v1186 = vor.u32 %v1184, %v1185
    %v1187 = vshll.u32 2102212464, %v1175
    %v1188 = vshrl.u32 920167782, %v1176
    %v1189 = vor.u32 %v1187, %v1188
    %v1190 = vshll.u32 920167782, %v1175
    %v1191 = vshrl.u32 1326507024, %v1176
    %v1192 = vor.u32 %v1190, %v1191
    %vm1193 = vcmp.lt.s32.totalorder %v1174, 1
    %vm1194 = vcmp.lt.s32.totalorder %v1174, 2
    %vm1195 = vcmp.lt.s32.totalorder %v1174, 3
    %vm1196 = vcmp.lt.s32.totalorder %v1174, 4
    %v1197 = vsel %vm1193, %v1177, %v1180
    %v1198 = vsel %vm1196, %v1186, 2102212464
    %v1199 = vsel %vm1195, %v1183, %v1198
    %v1200 = vsel %vm1194, %v1197, %v1199
    %v1201 = vsel %vm1193, %v1180, %v1183
    %v1202 = vsel %vm1196, %v1189, 920167782
    %v1203 = vsel %vm1195, %v1186, %v1202
    %v1204 = vsel %vm1194, %v1201, %v1203
    %v1205 = vsel %vm1193, %v1183, %v1186
    %v1206 = vsel %vm1196, %v1192, 1326507024
    %v1207 = vsel %vm1195, %v1189, %v1206
    %v1208 = vsel %vm1194, %v1205, %v1207
    %v1209 = vshll.u32 %v1169, 8
    %v1210 = vand.u32 %v1209, 65535
    %v1211 = vshrl.u32 %v1209, 16
    %v1212 = vand.u32 %v1208, 65535
    %v1213 = vshrl.u32 %v1208, 16
    %v1214 = vmul.u32 %v1210, %v1212
    %v1215 = vmul.u32 %v1210, %v1213
    %v1216 = vmul.u32 %v1211, %v1212
    %v1217 = vmul.u32 %v1211, %v1213
    %v1218 = vshll.u32 %v1215, 16
    %v1219 = vshrl.u32 %v1215, 16
    %v1220 = vshll.u32 %v1216, 16
    %v1221 = vshrl.u32 %v1216, 16
    %vm1222 = vc.u32 %v1214, %v1218
    %v1223 = vsel %vm1222, 1, 0
    %v1224 = vadd.s32 %v1214, %v1218
    %v1225 = vadd.s32 %v1217, %v1223
    %vm1226 = vc.u32 %v1224, %v1220
    %v1227 = vsel %vm1226, 1, 0
    %v1228 = vadd.s32 %v1224, %v1220
    %v1229 = vadd.s32 %v1225, %v1227
    %v1230 = vadd.s32 %v1229, %v1219
    %v1231 = vadd.s32 %v1230, %v1221
    %v1232 = vand.u32 %v1209, 65535
    %v1233 = vshrl.u32 %v1209, 16
    %v1234 = vand.u32 %v1204, 65535
    %v1235 = vshrl.u32 %v1204, 16
    %v1236 = vmul.u32 %v1232, %v1234
    %v1237 = vmul.u32 %v1232, %v1235
    %v1238 = vmul.u32 %v1233, %v1234
    %v1239 = vmul.u32 %v1233, %v1235
    %v1240 = vshll.u32 %v1237, 16
    %v1241 = vshrl.u32 %v1237, 16
    %v1242 = vshll.u32 %v1238, 16
    %v1243 = vshrl.u32 %v1238, 16
    %vm1244 = vc.u32 %v1236, %v1240
    %v1245 = vsel %vm1244, 1, 0
    %v1246 = vadd.s32 %v1236, %v1240
    %v1247 = vadd.s32 %v1239, %v1245
    %vm1248 = vc.u32 %v1246, %v1242
    %v1249 = vsel %vm1248, 1, 0
    %v1250 = vadd.s32 %v1246, %v1242
    %v1251 = vadd.s32 %v1247, %v1249
    %v1252 = vadd.s32 %v1251, %v1241
    %v1253 = vadd.s32 %v1252, %v1243
    %v1254 = vmul.u32 %v1209, %v1200
    %v1255 = vadd.s32 %v1231, %v1250
    %vm1256 = vc.u32 %v1231, %v1250
    %v1257 = vadd.s32 %v1253, 1
    %v1258 = vsel %vm1256, %v1257, %v1253
    %v1259 = vadd.s32 %v1254, %v1258
    %v1260 = vadd.s32 %v1259, 536870912
    %v1261 = vshrl.u32 %v1260, 30
    %v1262 = vshll.u32 %v1261, 30
    %v1263 = vsub.s32 %v1259, %v1262
    %vm1264 = vcmp.lt.s32.totalorder %v1263, 0
    %v1265 = vsub.s32 0, %v1263
    %v1266 = vsel %vm1264, %v1265, %v1263
    %v1267 = vclz %v1266
    %v1268 = vsub.s32 %v1267, 2
    %vm1269 = vcmp.gt.s32.totalorder 0, %v1268
    %v1270 = vsel %vm1269, 0, %v1268
    %v1271 = vsub.s32 32, %v1270
    %v1272 = vshll.u32 %v1263, %v1270
    %v1273 = vshrl.u32 %v1255, %v1271
    %v1274 = vor.u32 %v1272, %v1273
    %v1275 = vsub.s32 4294967266, %v1270
    %v1276 = vadd.s32 %v1275, 127
    %v1277 = vshll.u32 %v1276, 23
    %v1278 = vor.u32 4788187, %v1277
    %v1279 = vand.u32 2147483647, %v1278
    %v1281 = vcvt.s32.f32 %v1274
    %v1282 = vmul.f32 %v1281, %v1279
    %v1283 = vxor.u32 %v1282, 2147483648
    %v1284 = vsel %vm1163, %v1283, %v1282
    %v1285 = vsub.s32 4, %v1261
    %v1286 = vsel %vm1163, %v1285, %v1261
    %v1287 = vsel %vm1162, %v79, %v1284
    %v1288 = vsel %vm1162, 0, %v1286
    %v1289 = vmul.f32 %v1287, %v1287
    %v1290 = vmul.f32 %v1289, -0.001358992
    %v1291 = vadd.f32 %v1290, 0.041655596
    %v1292 = vmul.f32 %v1289, %v1291
    %v1293 = vadd.f32 %v1292, -0.4999988
    %v1294 = vmul.f32 %v1289, %v1293
    %v1295 = vadd.f32 1.0, %v1294
    %v1296 = vmul.f32 %v1287, %v1287
    %v1297 = vmul.f32 %v1296, -0.00019511016
    %v1298 = vadd.f32 %v1297, 0.008332121
    %v1299 = vmul.f32 %v1296, %v1298
    %v1300 = vadd.f32 %v1299, -0.16666654
    %v1301 = vmul.f32 %v1296, %v1300
    %v1302 = vadd.f32 %v1301, 1.0
    %v1303 = vmul.f32 %v1302, %v1287
    %vm1304 = vweird.f32 %v79
    %v1305 = vadd.s32 %v1288, 3
    %v1306 = vand.u32 %v1305, 3
    %vm1307 = vcmp.lt.s32.totalorder %v1306, 2
    %vm1308 = vcmp.eq.s32.totalorder %v1306, 0
    %v1309 = vxor.u32 %v1303, 2147483648
    %v1310 = vsel %vm1308, %v1295, %v1309
    %vm1311 = vcmp.eq.s32.totalorder %v1306, 2
    %v1312 = vxor.u32 %v1295, 2147483648
    %v1313 = vsel %vm1311, %v1312, %v1303
    %v1314 = vsel %vm1307, %v1310, %v1313
    %v1315 = vsel %vm1304, nan, %v1314
    %v1316 = vld [vmem:[%s0] sm:$0xf]
    %v1317 = vpack.c.bf16 %v233, %v233
    %v1318 = vpack.c.bf16 %v387, %v387
    %v1319 = vpack.c.bf16 %v541, %v541
    %v1320 = vpack.c.bf16 %v695, %v695
    %v1321 = vsub.f32 0.0, %v850
    %v1322 = vsub.f32 0.0, %v1005
    %v1323 = vsub.f32 0.0, %v1160
    %v1324 = vsub.f32 0.0, %v1315
    %v1325 = vpack.c.bf16 %v1321, %v1321
    %v1326 = vpack.c.bf16 %v1322, %v1322
    %v1327 = vpack.c.bf16 %v1323, %v1323
    %v1328 = vpack.c.bf16 %v1324, %v1324
    %v1333 = vunpack.c.l.b16 %v1317
    %v1334 = vunpack.c.l.b16 %v1318
    %v1335 = vunpack.c.l.b16 %v1319
    %v1336 = vunpack.c.l.b16 %v1320
    %v1337 = vpack.c.b16 %v1334, %v1333
    %v1338 = vpack.c.b16 %v1336, %v1335
    %v1345 = vunpack.c.l.b16 %v1325
    %v1346 = vunpack.c.l.b16 %v1326
    %v1347 = vunpack.c.l.b16 %v1327
    %v1348 = vunpack.c.l.b16 %v1328
    %v1349 = vpack.c.b16 %v1346, %v1345
    %v1350 = vpack.c.b16 %v1348, %v1347
    %vm1353 = vcmask 261120
    %v1355 = vsel %vm1353, %v1316, 0
    %1357 = vmatpush.bf16.msra.mxu0 0
    %1358 = vmatpush.bf16.msra.mxu0 0
    %1359 = vmatpush.bf16.msra.mxu0 0
    %1360 = vmatpush.bf16.msra.mxu0 0
    %1361 = vmatpush.bf16.msra.mxu0 0
    %1362 = vmatpush.bf16.msra.mxu0 0
    %1363 = vmatpush.bf16.msra.mxu0 %v1338
    %1364 = vmatpush.bf16.msra.mxu0 %v1337
    %1365 = vmatmul.bf16.gmra.mxu0 %v1355
    %v1366 = vpop.f32.mrf.mxu0
    %v1367 = vadd.f32 0.0, %v1366
    %v1368 = vpop.f32.mrf.mxu0
    %1369 = vdwg.mxu0
    %1370 = vmatpush.bf16.msra.mxu0 0
    %1371 = vmatpush.bf16.msra.mxu0 0
    %1372 = vmatpush.bf16.msra.mxu0 0
    %1373 = vmatpush.bf16.msra.mxu0 0
    %1374 = vmatpush.bf16.msra.mxu0 0
    %1375 = vmatpush.bf16.msra.mxu0 0
    %1376 = vmatpush.bf16.msra.mxu0 %v1350
    %1377 = vmatpush.bf16.msra.mxu0 %v1349
    %1378 = vmatmul.bf16.gmra.mxu0 %v1355
    %v1379 = vpop.f32.mrf.mxu0
    %v1380 = vadd.f32 0.0, %v1379
    %v1381 = vpop.f32.mrf.mxu0
    %1382 = vdwg.mxu0
    %s1383 = sshra.s32 %s17, 7
    %s1384 = sand.u32 %s17, 127
    %s1385 = scalar_lea.vmem [#allocation2], %s1383
    %1386 = vst [vmem:[%s1385] sm:$0xff] %v1367
    %s1387 = scalar_lea.vmem [#allocation3], %s1383
    %1388 = vst [vmem:[%s1387] sm:$0xff] %v1380
    %p1389 = scmp.eq.s32.totalorder 0, 0
    // Predicated region
    $region6: #{_mse_and_kappa_jit.3} parent=1 // pred_check
      %p1390 = pneg %p1389
    $region7: #{_mse_and_kappa_jit.3} parent=1 // pred_check_branch
      %1392 = sbr.rel (%p1390) target = $region9
    $region8: #{_mse_and_kappa_jit.3} parent=1 // pred_region
      %v1393 = vld [vmem:[#allocation2] sm:$0xff]
      %v1394 = vld [vmem:[#allocation3] sm:$0xff]
      %v1395 = vmul.f32 %v1393, %v1393
      %v1396 = vmul.f32 %v1394, %v1394
      %v1397 = vadd.f32 %v1395, %v1396
      %v1398 = vrot.slane %v1397, 4
      %v1399 = vadd.f32 %v1397, %v1398
      %v1400 = vrot.slane %v1399, 2
      %v1401 = vadd.f32 %v1399, %v1400
      %v1402 = vrot.slane %v1401, 1
      %v1403 = vadd.f32 %v1401, %v1402
      %1404 = vrot.lane.b32.xlu0 %v1393, 96
      %v1405 = vpop.permute.xlu0 %1404
      %1406 = vrot.lane.b32.xlu0 %v1394, 96
      %v1407 = vpop.permute.xlu0 %1406
      %v1408 = vmul.f32 %v1393, %v1405
      %v1409 = vmul.f32 %v1394, %v1407
      %v1410 = vadd.f32 %v1408, %v1409
      %v1411 = vrot.slane %v1410, 4
      %v1412 = vadd.f32 %v1410, %v1411
      %v1413 = vrot.slane %v1412, 2
      %v1414 = vadd.f32 %v1412, %v1413
      %v1415 = vrot.slane %v1414, 1
      %v1416 = vadd.f32 %v1414, %v1415
      %v1417 = vmul.f32 %v1394, %v1405
      %v1418 = vmul.f32 %v1393, %v1407
      %v1419 = vsub.f32 %v1417, %v1418
      %v1420 = vrot.slane %v1419, 4
      %v1421 = vadd.f32 %v1419, %v1420
      %v1422 = vrot.slane %v1421, 2
      %v1423 = vadd.f32 %v1421, %v1422
      %v1424 = vrot.slane %v1423, 1
      %v1425 = vadd.f32 %v1423, %v1424
      %v1426 = vmul.f32 %v1416, %v1416
      %v1427 = vmul.f32 %v1425, %v1425
      %v1428 = vadd.f32 %v1426, %v1427
      %v1429 = vrsqrt.pop %v1428
      %v1430 = vmul.f32 %v1429, %v1428
      %v1431 = vmul.f32 %v1430, %v1429
      %v1432 = vmul.f32 0.5, %v1431
      %v1433 = vsub.f32 1.5, %v1432
      %v1434 = vmul.f32 %v1429, %v1433
      %v1435 = vmul.f32 %v1428, %v1434
      %vm1436 = vcmp.eq.f32.partialorder %v1428, inf
      %v1437 = vsel %vm1436, %v1428, %v1435
      %vm1438 = vcmp.eq.f32.partialorder %v1428, 0.0
      %v1439 = vand.u32 %v1428, 2147483648
      %v1440 = vsel %vm1438, %v1439, %v1437
      %1441 = vrot.lane.b32.xlu0 %v1440, 32
      %v1442 = vpop.permute.xlu0 %1441
      %v1443 = vadd.f32 %v1440, %v1442
      %v1444 = vadd.f32 %v1403, %v1443
      %v1445 = vsub.f32 %v1403, %v1443
      %1446 = vrot.lane.b32.xlu0 %v1405, 96
      %v1447 = vpop.permute.xlu0 %1446
      %1448 = vrot.lane.b32.xlu0 %v1407, 96
      %v1449 = vpop.permute.xlu0 %1448
      %v1450 = vmul.f32 %v1393, %v1447
      %v1451 = vmul.f32 %v1394, %v1449
      %v1452 = vadd.f32 %v1450, %v1451
      %v1453 = vrot.slane %v1452, 4
      %v1454 = vadd.f32 %v1452, %v1453
      %v1455 = vrot.slane %v1454, 2
      %v1456 = vadd.f32 %v1454, %v1455
      %v1457 = vrot.slane %v1456, 1
      %v1458 = vadd.f32 %v1456, %v1457
      %v1459 = vmul.f32 %v1394, %v1447
      %v1460 = vmul.f32 %v1393, %v1449
      %v1461 = vsub.f32 %v1459, %v1460
      %v1462 = vrot.slane %v1461, 4
      %v1463 = vadd.f32 %v1461, %v1462
      %v1464 = vrot.slane %v1463, 2
      %v1465 = vadd.f32 %v1463, %v1464
      %v1466 = vrot.slane %v1465, 1
      %v1467 = vadd.f32 %v1465, %v1466
      %v1468 = vmul.f32 %v1458, %v1458
      %v1469 = vmul.f32 %v1467, %v1467
      %v1470 = vadd.f32 %v1468, %v1469
      %v1471 = vrsqrt.pop %v1470
      %v1472 = vmul.f32 %v1471, %v1470
      %v1473 = vmul.f32 %v1472, %v1471
      %v1474 = vmul.f32 0.5, %v1473
      %v1475 = vsub.f32 1.5, %v1474
      %v1476 = vmul.f32 %v1471, %v1475
      %v1477 = vmul.f32 %v1470, %v1476
      %vm1478 = vcmp.eq.f32.partialorder %v1470, inf
      %v1479 = vsel %vm1478, %v1470, %v1477
      %vm1480 = vcmp.eq.f32.partialorder %v1470, 0.0
      %v1481 = vand.u32 %v1470, 2147483648
      %v1482 = vsel %vm1480, %v1481, %v1479
      %v1483 = vadd.f32 %v1444, %v1482
      %v1484 = vsub.f32 %v1445, %v1482
      %vm1485 = vcmask 1040384
      %v1486 = vsel %vm1485, %v1483, -inf
      %1487 = vmax.xlane.f32.xlu0 %v1486
      %v1488 = vpop.xlane.xlu0 %1487
      %v1489 = vrot.slane %v1488, 4
      %v1490 = vmax.f32 %v1488, %v1489
      %v1491 = vrot.slane %v1490, 2
      %v1492 = vmax.f32 %v1490, %v1491
      %v1493 = vrot.slane %v1492, 1
      %v1494 = vmax.f32 %v1492, %v1493
      %s1495 = vtos %v1494
      %v1496 = vsel %vm1485, %v1484, inf
      %1497 = vmin.xlane.f32.xlu0 %v1496
      %v1498 = vpop.xlane.xlu0 %1497
      %v1499 = vrot.slane %v1498, 4
      %v1500 = vmin.f32 %v1498, %v1499
      %v1501 = vrot.slane %v1500, 2
      %v1502 = vmin.f32 %v1500, %v1501
      %v1503 = vrot.slane %v1502, 1
      %v1504 = vmin.f32 %v1502, %v1503
      %s1505 = vtos %v1504
      %v1506 = vstv %s1505
      %v1507 = vrcp.pop %v1506
      %v1508 = vmul.f32 %v1506, %v1507
      %v1509 = vsub.f32 1.0, %v1508
      %v1510 = vmul.f32 %v1507, %v1509
      %v1511 = vadd.f32 %v1507, %v1510
      %vm1512 = vweird.f32 %v1506
      %vm1513 = vweird.f32 %v1507
      %vm1514 = vmor %vm1512, %vm1513
      %v1515 = vsel %vm1514, %v1507, %v1511
      %v1516 = vand.u32 2147483647, %v1506
      %vm1517 = vcmp.eq.f32.partialorder %v1516, 8.507059e+37
      %v1518 = vand.u32 %v1506, 2147483648
      %v1519 = vor.u32 1.1754944e-38, %v1518
      %v1520 = vsel %vm1517, %v1519, %v1515
      %s1521 = vtos %v1520
      %s1522 = smul.f32 %s1495, %s1521
      %s1523 = scalar_lea.smem [#allocation4], 0
      %1524 = sst [smem:[%s1523]] %s1522
    $region9: #{_mse_and_kappa_jit.3} parent=1 // pred_fallthru
      _
    // Predicated region
    $region10: #{_mse_and_kappa_jit.3} parent=1 // pred_check
      _
    $region11: #{_mse_and_kappa_jit.3} parent=1 // pred_check_branch
      %1526 = sbr.rel (0) target = $region13
    $region12: #{_mse_and_kappa_jit.3} parent=1 // pred_region
      %1528 = vsyncadd [#allocation5], 0
      %s1530 = sshll.u32 %s1, 4
      %s1531 = int_to_ptr.hbm [resolvable:$true] %s1530
      %1533 = dma.smem_to_hbm [#allocation4], 16, %s1531, [#allocation5]
    $region13: #{_mse_and_kappa_jit.3} parent=1 // pred_fallthru
      _
    // Predicated region
    $region14: #{_mse_and_kappa_jit.3} parent=1 // pred_check
      _
    $region15: #{_mse_and_kappa_jit.3} parent=1 // pred_check_branch
      %1535 = sbr.rel (0) target = $region17
    $region16: #{_mse_and_kappa_jit.3} parent=1 // pred_region
      %1537 = dma.done [#allocation5], 16
    $region17: #{_mse_and_kappa_jit.3} parent=1 // pred_fallthru
      _
    %1538 = sfence
    %1539 = vsyncpa [#allocation5], 1

</llo_original>
